<compile_context>
chip_gen: v6e
topology: v6e:2x2x1
jax: 0.10.0
libtpu: 0.0.40
codegen_flags: <defaults>
</compile_context>

<pallas_src>
import math
import functools

import jax
import jax.numpy as jnp
from jax import lax
from jax.experimental import pallas as pl
from jax.experimental.pallas import tpu as pltpu


# ----------------------------------------------------------------------------
# Pallas kernel: one full residual-attention block for a single batch element.
# ----------------------------------------------------------------------------
def _rab_kernel(x_ref,                      # (1, S, D)  f32
                ln1_w_ref, ln1_b_ref,       # (1, D) f32 each
                w_qkv_ref,                  # (3D, D) bf16  (PyTorch in_proj_weight)
                b_qkv_ref,                  # (1, 3D) f32
                w_out_ref,                  # (D, D)  bf16  (PyTorch out_proj.weight)
                b_out_ref,                  # (1, D)  f32
                ln2_w_ref, ln2_b_ref,       # (1, D) f32 each
                w_fc_ref,                   # (4D, D) bf16  (PyTorch c_fc.weight)
                b_fc_ref,                   # (1, 4D) f32
                w_proj_ref,                 # (D, 4D) bf16  (PyTorch c_proj.weight)
                b_proj_ref,                 # (1, D)  f32
                o_ref,                      # (1, S, D)
                *, n_head):
    x = x_ref[0].astype(jnp.float32)        # (S, D)
    S, D = x.shape
    H = n_head
    Dh = D // H
    scale = 1.0 / math.sqrt(Dh)

    # contract last dims of both operands: (S, K) x (N, K) -> (S, N)   (i.e. a @ W.T)
    dn_nt = (((1,), (1,)), ((), ()))

    def layer_norm(v, w, b):
        mu = jnp.mean(v, axis=-1, keepdims=True)
        c = v - mu
        var = jnp.mean(c * c, axis=-1, keepdims=True)
        return c * lax.rsqrt(var + 1e-5) * w + b

    # ---------------- attention branch ----------------
    h1 = layer_norm(x, ln1_w_ref[...], ln1_b_ref[...])                  # (S, D) f32

    # Fused QKV projection: one full-width MXU matmul + one lane-dense bias add.
    qkv = lax.dot_general(h1.astype(jnp.bfloat16), w_qkv_ref[...], dn_nt,
                          preferred_element_type=jnp.float32) + b_qkv_ref[...]  # (S, 3D)
    q = qkv[:, :D]
    k = qkv[:, D:2 * D]
    v = qkv[:, 2 * D:]

    # Per-head attention (Dh-wide matmuls are architecturally narrow; the FLOP
    # budget is dominated by the fused projections / MLP which run full-width).
    head_outs = []
    for h in range(H):                                                   # static loop
        lo, hi = h * Dh, (h + 1) * Dh
        q_h = q[:, lo:hi].astype(jnp.bfloat16)
        k_h = k[:, lo:hi].astype(jnp.bfloat16)
        v_h = v[:, lo:hi].astype(jnp.bfloat16)

        s = lax.dot_general(q_h, k_h, dn_nt,
                            preferred_element_type=jnp.float32) * scale  # (S, S) f32
        m = jnp.max(s, axis=-1, keepdims=True)
        p = jnp.exp(s - m)
        p = p * pl.reciprocal(jnp.sum(p, axis=-1, keepdims=True), approx=True)

        head_outs.append(jnp.dot(p.astype(jnp.bfloat16), v_h,
                                 preferred_element_type=jnp.float32))    # (S, Dh)

    attn = jnp.concatenate(head_outs, axis=-1)                           # (S, D) f32
    # Single full-width out_proj matmul.
    attn = lax.dot_general(attn.astype(jnp.bfloat16), w_out_ref[...], dn_nt,
                           preferred_element_type=jnp.float32) + b_out_ref[...]
    x = x + attn                                                         # residual 1

    # ---------------- MLP branch ----------------
    h2 = layer_norm(x, ln2_w_ref[...], ln2_b_ref[...])                   # (S, D)
    f = lax.dot_general(h2.astype(jnp.bfloat16), w_fc_ref[...], dn_nt,
                        preferred_element_type=jnp.float32) + b_fc_ref[...]   # (S, 4D)
    f = f * jax.nn.sigmoid(1.702 * f)                                    # QuickGELU f32
    mlp = lax.dot_general(f.astype(jnp.bfloat16), w_proj_ref[...], dn_nt,
                          preferred_element_type=jnp.float32) + b_proj_ref[...]
    x = x + mlp                                                          # residual 2

    o_ref[0] = x.astype(o_ref.dtype)


def _full_spec(shape):
    zeros = (0,) * len(shape)
    return pl.BlockSpec(shape, lambda b, _z=zeros: _z)


# ----------------------------------------------------------------------------
# One-time parameter prep (outside jit): bf16 weights in PyTorch layouts,
# lane-dense f32 biases / LN params.  No per-call transposes.
# ----------------------------------------------------------------------------
def prepare_params(params):
    D = params["ln1_w"].shape[0]
    F = params["fc_b"].shape[0]
    bf16 = jnp.bfloat16
    f32 = jnp.float32
    return {
        "ln1_w": params["ln1_w"].reshape(1, D).astype(f32),
        "ln1_b": params["ln1_b"].reshape(1, D).astype(f32),
        "w_qkv": params["in_proj_weight"].astype(bf16),          # (3D, D)
        "b_qkv": params["in_proj_bias"].reshape(1, 3 * D).astype(f32),
        "w_out": params["out_proj_weight"].astype(bf16),         # (D, D)
        "b_out": params["out_proj_bias"].reshape(1, D).astype(f32),
        "ln2_w": params["ln2_w"].reshape(1, D).astype(f32),
        "ln2_b": params["ln2_b"].reshape(1, D).astype(f32),
        "w_fc": params["fc_w"].astype(bf16),                     # (4D, D)
        "b_fc": params["fc_b"].reshape(1, F).astype(f32),
        "w_proj": params["proj_w"].astype(bf16),                 # (D, 4D)
        "b_proj": params["proj_b"].reshape(1, D).astype(f32),
    }


# ----------------------------------------------------------------------------
# Wrapper: pallas_call with batch grid.
# ----------------------------------------------------------------------------
@functools.partial(jax.jit, static_argnames=("n_head",))
def residual_attention_block(x, kp, n_head):
    """x: (seq, batch, d_model) float32.  kp: output of prepare_params."""
    S, B, D = x.shape
    F = kp["b_fc"].shape[1]

    xb = jnp.transpose(x, (1, 0, 2))  # (B, S, D) so the size-1 block dim is leading

    kernel = functools.partial(_rab_kernel, n_head=n_head)

    out = pl.pallas_call(
        kernel,
        out_shape=jax.ShapeDtypeStruct((B, S, D), x.dtype),
        grid_spec=pltpu.PrefetchScalarGridSpec(
            num_scalar_prefetch=0,
            grid=(B,),
            in_specs=[
                pl.BlockSpec((1, S, D), lambda b: (b, 0, 0)),    # x
                _full_spec((1, D)), _full_spec((1, D)),          # ln1 w, b
                _full_spec((3 * D, D)), _full_spec((1, 3 * D)),  # fused qkv w, b
                _full_spec((D, D)), _full_spec((1, D)),          # out_proj w, b
                _full_spec((1, D)), _full_spec((1, D)),          # ln2 w, b
                _full_spec((F, D)), _full_spec((1, F)),          # c_fc w, b
                _full_spec((D, F)), _full_spec((1, D)),          # c_proj w, b
            ],
            out_specs=pl.BlockSpec((1, S, D), lambda b: (b, 0, 0)),
        ),
        compiler_params=pltpu.CompilerParams(
            dimension_semantics=("parallel",),          # batch elems independent
            vmem_limit_bytes=64 * 1024 * 1024,          # above default scoped limit
        ),
    )(xb, kp["ln1_w"], kp["ln1_b"], kp["w_qkv"], kp["b_qkv"],
      kp["w_out"], kp["b_out"], kp["ln2_w"], kp["ln2_b"],
      kp["w_fc"], kp["b_fc"], kp["w_proj"], kp["b_proj"])

    return jnp.transpose(out, (1, 0, 2))  # back to (S, B, D)


# ----------------------------------------------------------------------------
# Pure-JAX f32 reference (mirrors the PyTorch module exactly) for validation.
# ----------------------------------------------------------------------------
def reference_block(x, params, n_head):
    S, B, D = x.shape
    H = n_head
    Dh = D // H

    def ln(v, w, b):
        mu = v.mean(-1, keepdims=True)
        var = ((v - mu) ** 2).mean(-1, keepdims=True)
        return (v - mu) / jnp.sqrt(var + 1e-5) * w + b

    h = ln(x, params["ln1_w"], params["ln1_b"])
    qkv = h @ params["in_proj_weight"].T + params["in_proj_bias"]   # (S, B, 3D)
    q, k, v = jnp.split(qkv, 3, axis=-1)
    q = q.reshape(S, B, H, Dh).transpose(1, 2, 0, 3)                # (B, H, S, Dh)
    k = k.reshape(S, B, H, Dh).transpose(1, 2, 0, 3)
    v = v.reshape(S, B, H, Dh).transpose(1, 2, 0, 3)
    s = jnp.einsum("bhsd,bhtd->bhst", q, k) / math.sqrt(Dh)
    p = jax.nn.softmax(s, axis=-1)
    o = jnp.einsum("bhst,bhtd->bhsd", p, v)
    o = o.transpose(2, 0, 1, 3).reshape(S, B, D)
    attn = o @ params["out_proj_weight"].T + params["out_proj_bias"]
    x = x + attn

    h = ln(x, params["ln2_w"], params["ln2_b"])
    f = h @ params["fc_w"].T + params["fc_b"]
    f = f * jax.nn.sigmoid(1.702 * f)
    x = x + f @ params["proj_w"].T + params["proj_b"]
    return x


# ----------------------------------------------------------------------------
def make_params(key, d_model):
    D, F = d_model, 4 * d_model
    ks = jax.random.split(key, 8)
    std = 0.02
    return {
        "in_proj_weight": std * jax.random.normal(ks[0], (3 * D, D), jnp.float32),
        "in_proj_bias":   std * jax.random.normal(ks[1], (3 * D,), jnp.float32),
        "out_proj_weight": std * jax.random.normal(ks[2], (D, D), jnp.float32),
        "out_proj_bias":   std * jax.random.normal(ks[3], (D,), jnp.float32),
        "ln1_w": jnp.ones((D,), jnp.float32),
        "ln1_b": jnp.zeros((D,), jnp.float32),
        "ln2_w": jnp.ones((D,), jnp.float32),
        "ln2_b": jnp.zeros((D,), jnp.float32),
        "fc_w": std * jax.random.normal(ks[4], (F, D), jnp.float32),
        "fc_b": std * jax.random.normal(ks[5], (F,), jnp.float32),
        "proj_w": std * jax.random.normal(ks[6], (D, F), jnp.float32),
        "proj_b": std * jax.random.normal(ks[7], (D,), jnp.float32),
    }


if __name__ == "__main__":
    SEQ, BATCH, D_MODEL, N_HEAD = 8, 2, 32, 4

    key = jax.random.PRNGKey(0)
    kx, kp_key = jax.random.split(key)
    x = jax.random.normal(kx, (SEQ, BATCH, D_MODEL), jnp.float32)
    params = make_params(kp_key, D_MODEL)

    kparams = prepare_params(params)          # one-time, outside jit

    y = residual_attention_block(x, kparams, N_HEAD)
    y = jax.block_until_ready(y)

    y_ref = reference_block(x, params, N_HEAD)
    assert y.shape == x.shape and y.dtype == x.dtype
    max_err = jnp.max(jnp.abs(y - y_ref))
    assert jnp.allclose(y, y_ref, atol=5e-3, rtol=1e-2), f"max abs err {max_err}"

    print("KERNEL_OK")
</pallas_src>

<mosaic_0001>
module attributes {stable_mosaic.version = 11 : i64} {
  func.func @_rab_kernel(%arg0: i32, %arg1: memref<1x8x32xf32, #tpu.memory_space<vmem>>, %arg2: memref<1x32xf32, #tpu.memory_space<vmem>>, %arg3: memref<1x32xf32, #tpu.memory_space<vmem>>, %arg4: memref<96x32xbf16, #tpu.memory_space<vmem>>, %arg5: memref<1x96xf32, #tpu.memory_space<vmem>>, %arg6: memref<32x32xbf16, #tpu.memory_space<vmem>>, %arg7: memref<1x32xf32, #tpu.memory_space<vmem>>, %arg8: memref<1x32xf32, #tpu.memory_space<vmem>>, %arg9: memref<1x32xf32, #tpu.memory_space<vmem>>, %arg10: memref<128x32xbf16, #tpu.memory_space<vmem>>, %arg11: memref<1x128xf32, #tpu.memory_space<vmem>>, %arg12: memref<32x128xbf16, #tpu.memory_space<vmem>>, %arg13: memref<1x32xf32, #tpu.memory_space<vmem>>, %arg14: memref<1x8x32xf32, #tpu.memory_space<vmem>>) attributes {dimension_semantics = [#tpu.dimension_semantics<parallel>], iteration_bounds = array<i64: 2>, scalar_prefetch = 0 : i64, scratch_operands = 0 : i64, tpu.core_type = #tpu.core_type<tc>, window_params = [{transform_indices = @transform_0, window_bounds = array<i64: 1, 8, 32>}, {pipeline_mode = #tpu.pipeline_mode<synchronous>, transform_indices = @transform_1, window_bounds = array<i64: 1, 32>}, {pipeline_mode = #tpu.pipeline_mode<synchronous>, transform_indices = @transform_2, window_bounds = array<i64: 1, 32>}, {pipeline_mode = #tpu.pipeline_mode<synchronous>, transform_indices = @transform_3, window_bounds = array<i64: 96, 32>}, {pipeline_mode = #tpu.pipeline_mode<synchronous>, transform_indices = @transform_4, window_bounds = array<i64: 1, 96>}, {pipeline_mode = #tpu.pipeline_mode<synchronous>, transform_indices = @transform_5, window_bounds = array<i64: 32, 32>}, {pipeline_mode = #tpu.pipeline_mode<synchronous>, transform_indices = @transform_6, window_bounds = array<i64: 1, 32>}, {pipeline_mode = #tpu.pipeline_mode<synchronous>, transform_indices = @transform_7, window_bounds = array<i64: 1, 32>}, {pipeline_mode = #tpu.pipeline_mode<synchronous>, transform_indices = @transform_8, window_bounds = array<i64: 1, 32>}, {pipeline_mode = #tpu.pipeline_mode<synchronous>, transform_indices = @transform_9, window_bounds = array<i64: 128, 32>}, {pipeline_mode = #tpu.pipeline_mode<synchronous>, transform_indices = @transform_10, window_bounds = array<i64: 1, 128>}, {pipeline_mode = #tpu.pipeline_mode<synchronous>, transform_indices = @transform_11, window_bounds = array<i64: 32, 128>}, {pipeline_mode = #tpu.pipeline_mode<synchronous>, transform_indices = @transform_12, window_bounds = array<i64: 1, 32>}, {transform_indices = @transform_13, window_bounds = array<i64: 1, 8, 32>}]} {
    %c0 = arith.constant 0 : index
    %c0_0 = arith.constant 0 : index
    %c0_1 = arith.constant 0 : index
    %0 = vector.load %arg1[%c0, %c0_0, %c0_1] : memref<1x8x32xf32, #tpu.memory_space<vmem>>, vector<1x8x32xf32>
    %1 = vector.shape_cast %0 : vector<1x8x32xf32> to vector<8x32xf32>
    %c0_2 = arith.constant 0 : index
    %c0_3 = arith.constant 0 : index
    %2 = vector.load %arg2[%c0_2, %c0_3] : memref<1x32xf32, #tpu.memory_space<vmem>>, vector<1x32xf32>
    %c0_4 = arith.constant 0 : index
    %c0_5 = arith.constant 0 : index
    %3 = vector.load %arg3[%c0_4, %c0_5] : memref<1x32xf32, #tpu.memory_space<vmem>>, vector<1x32xf32>
    %cst = arith.constant dense<0.000000e+00> : vector<8xf32>
    %4 = vector.multi_reduction <add>, %1, %cst [1] : vector<8x32xf32> to vector<8xf32>
    %5 = vector.shape_cast %4 : vector<8xf32> to vector<8x1xf32>
    %cst_6 = arith.constant 3.200000e+01 : f32
    %6 = vector.broadcast %cst_6 : f32 to vector<8x1xf32>
    %7 = arith.divf %5, %6 : vector<8x1xf32>
    %8 = vector.broadcast %7 : vector<8x1xf32> to vector<8x32xf32>
    %9 = arith.subf %1, %8 : vector<8x32xf32>
    %10 = arith.mulf %9, %9 : vector<8x32xf32>
    %cst_7 = arith.constant dense<0.000000e+00> : vector<8xf32>
    %11 = vector.multi_reduction <add>, %10, %cst_7 [1] : vector<8x32xf32> to vector<8xf32>
    %12 = vector.shape_cast %11 : vector<8xf32> to vector<8x1xf32>
    %cst_8 = arith.constant 3.200000e+01 : f32
    %13 = vector.broadcast %cst_8 : f32 to vector<8x1xf32>
    %14 = arith.divf %12, %13 : vector<8x1xf32>
    %cst_9 = arith.constant 9.99999974E-6 : f32
    %15 = vector.broadcast %cst_9 : f32 to vector<8x1xf32>
    %16 = arith.addf %14, %15 : vector<8x1xf32>
    %17 = math.rsqrt %16 : vector<8x1xf32>
    %18 = vector.broadcast %17 : vector<8x1xf32> to vector<8x32xf32>
    %19 = arith.mulf %9, %18 : vector<8x32xf32>
    %20 = vector.broadcast %2 : vector<1x32xf32> to vector<8x32xf32>
    %21 = arith.mulf %19, %20 : vector<8x32xf32>
    %22 = vector.broadcast %3 : vector<1x32xf32> to vector<8x32xf32>
    %23 = arith.addf %21, %22 : vector<8x32xf32>
    %24 = arith.truncf %23 : vector<8x32xf32> to vector<8x32xbf16>
    %c0_10 = arith.constant 0 : index
    %c0_11 = arith.constant 0 : index
    %25 = vector.load %arg4[%c0_10, %c0_11] : memref<96x32xbf16, #tpu.memory_space<vmem>>, vector<96x32xbf16>
    %cst_12 = arith.constant dense<0.000000e+00> : vector<8x96xf32>
    %26 = tpu.matmul %24, %25, %cst_12 {dimension_numbers = #tpu.dot_dimension_numbers<[1], [1], [0], [0], [0, 0, 1, 0], [], []>} : vector<8x32xbf16>, vector<96x32xbf16>, vector<8x96xf32> -> vector<8x96xf32>
    %c0_13 = arith.constant 0 : index
    %c0_14 = arith.constant 0 : index
    %27 = vector.load %arg5[%c0_13, %c0_14] : memref<1x96xf32, #tpu.memory_space<vmem>>, vector<1x96xf32>
    %28 = vector.broadcast %27 : vector<1x96xf32> to vector<8x96xf32>
    %29 = arith.addf %26, %28 : vector<8x96xf32>
    %30 = vector.extract_strided_slice %29 {offsets = [0, 0], sizes = [8, 32], strides = [1, 1]} : vector<8x96xf32> to vector<8x32xf32>
    %31 = vector.extract_strided_slice %29 {offsets = [0, 32], sizes = [8, 32], strides = [1, 1]} : vector<8x96xf32> to vector<8x32xf32>
    %32 = vector.extract_strided_slice %29 {offsets = [0, 64], sizes = [8, 32], strides = [1, 1]} : vector<8x96xf32> to vector<8x32xf32>
    %33 = vector.extract_strided_slice %30 {offsets = [0, 0], sizes = [8, 8], strides = [1, 1]} : vector<8x32xf32> to vector<8x8xf32>
    %34 = arith.truncf %33 : vector<8x8xf32> to vector<8x8xbf16>
    %35 = vector.extract_strided_slice %31 {offsets = [0, 0], sizes = [8, 8], strides = [1, 1]} : vector<8x32xf32> to vector<8x8xf32>
    %36 = arith.truncf %35 : vector<8x8xf32> to vector<8x8xbf16>
    %37 = vector.extract_strided_slice %32 {offsets = [0, 0], sizes = [8, 8], strides = [1, 1]} : vector<8x32xf32> to vector<8x8xf32>
    %38 = arith.truncf %37 : vector<8x8xf32> to vector<8x8xbf16>
    %cst_15 = arith.constant dense<0.000000e+00> : vector<8x8xf32>
    %39 = tpu.matmul %34, %36, %cst_15 {dimension_numbers = #tpu.dot_dimension_numbers<[1], [1], [0], [0], [0, 0, 1, 0], [], []>} : vector<8x8xbf16>, vector<8x8xbf16>, vector<8x8xf32> -> vector<8x8xf32>
    %cst_16 = arith.constant 0.353553385 : f32
    %40 = vector.broadcast %cst_16 : f32 to vector<8x8xf32>
    %41 = arith.mulf %39, %40 : vector<8x8xf32>
    %cst_17 = arith.constant dense<0xFF800000> : vector<8xf32>
    %42 = vector.multi_reduction <maximumf>, %41, %cst_17 [1] : vector<8x8xf32> to vector<8xf32>
    %43 = vector.shape_cast %42 : vector<8xf32> to vector<8x1xf32>
    %44 = vector.broadcast %43 : vector<8x1xf32> to vector<8x8xf32>
    %45 = arith.subf %41, %44 : vector<8x8xf32>
    %46 = math.exp %45 : vector<8x8xf32>
    %cst_18 = arith.constant dense<0.000000e+00> : vector<8xf32>
    %47 = vector.multi_reduction <add>, %46, %cst_18 [1] : vector<8x8xf32> to vector<8xf32>
    %48 = vector.shape_cast %47 : vector<8xf32> to vector<8x1xf32>
    %49 = tpu.reciprocal %48 {approx = true} : vector<8x1xf32> -> vector<8x1xf32>
    %50 = vector.broadcast %49 : vector<8x1xf32> to vector<8x8xf32>
    %51 = arith.mulf %46, %50 : vector<8x8xf32>
    %52 = arith.truncf %51 : vector<8x8xf32> to vector<8x8xbf16>
    %cst_19 = arith.constant dense<0.000000e+00> : vector<8x8xf32>
    %53 = tpu.matmul %52, %38, %cst_19 {dimension_numbers = #tpu.dot_dimension_numbers<[1], [0], [0], [1], [0, 0, 1, 1], [], []>} : vector<8x8xbf16>, vector<8x8xbf16>, vector<8x8xf32> -> vector<8x8xf32>
    %54 = vector.extract_strided_slice %30 {offsets = [0, 8], sizes = [8, 8], strides = [1, 1]} : vector<8x32xf32> to vector<8x8xf32>
    %55 = arith.truncf %54 : vector<8x8xf32> to vector<8x8xbf16>
    %56 = vector.extract_strided_slice %31 {offsets = [0, 8], sizes = [8, 8], strides = [1, 1]} : vector<8x32xf32> to vector<8x8xf32>
    %57 = arith.truncf %56 : vector<8x8xf32> to vector<8x8xbf16>
    %58 = vector.extract_strided_slice %32 {offsets = [0, 8], sizes = [8, 8], strides = [1, 1]} : vector<8x32xf32> to vector<8x8xf32>
    %59 = arith.truncf %58 : vector<8x8xf32> to vector<8x8xbf16>
    %cst_20 = arith.constant dense<0.000000e+00> : vector<8x8xf32>
    %60 = tpu.matmul %55, %57, %cst_20 {dimension_numbers = #tpu.dot_dimension_numbers<[1], [1], [0], [0], [0, 0, 1, 0], [], []>} : vector<8x8xbf16>, vector<8x8xbf16>, vector<8x8xf32> -> vector<8x8xf32>
    %cst_21 = arith.constant 0.353553385 : f32
    %61 = vector.broadcast %cst_21 : f32 to vector<8x8xf32>
    %62 = arith.mulf %60, %61 : vector<8x8xf32>
    %cst_22 = arith.constant dense<0xFF800000> : vector<8xf32>
    %63 = vector.multi_reduction <maximumf>, %62, %cst_22 [1] : vector<8x8xf32> to vector<8xf32>
    %64 = vector.shape_cast %63 : vector<8xf32> to vector<8x1xf32>
    %65 = vector.broadcast %64 : vector<8x1xf32> to vector<8x8xf32>
    %66 = arith.subf %62, %65 : vector<8x8xf32>
    %67 = math.exp %66 : vector<8x8xf32>
    %cst_23 = arith.constant dense<0.000000e+00> : vector<8xf32>
    %68 = vector.multi_reduction <add>, %67, %cst_23 [1] : vector<8x8xf32> to vector<8xf32>
    %69 = vector.shape_cast %68 : vector<8xf32> to vector<8x1xf32>
    %70 = tpu.reciprocal %69 {approx = true} : vector<8x1xf32> -> vector<8x1xf32>
    %71 = vector.broadcast %70 : vector<8x1xf32> to vector<8x8xf32>
    %72 = arith.mulf %67, %71 : vector<8x8xf32>
    %73 = arith.truncf %72 : vector<8x8xf32> to vector<8x8xbf16>
    %cst_24 = arith.constant dense<0.000000e+00> : vector<8x8xf32>
    %74 = tpu.matmul %73, %59, %cst_24 {dimension_numbers = #tpu.dot_dimension_numbers<[1], [0], [0], [1], [0, 0, 1, 1], [], []>} : vector<8x8xbf16>, vector<8x8xbf16>, vector<8x8xf32> -> vector<8x8xf32>
    %75 = vector.extract_strided_slice %30 {offsets = [0, 16], sizes = [8, 8], strides = [1, 1]} : vector<8x32xf32> to vector<8x8xf32>
    %76 = arith.truncf %75 : vector<8x8xf32> to vector<8x8xbf16>
    %77 = vector.extract_strided_slice %31 {offsets = [0, 16], sizes = [8, 8], strides = [1, 1]} : vector<8x32xf32> to vector<8x8xf32>
    %78 = arith.truncf %77 : vector<8x8xf32> to vector<8x8xbf16>
    %79 = vector.extract_strided_slice %32 {offsets = [0, 16], sizes = [8, 8], strides = [1, 1]} : vector<8x32xf32> to vector<8x8xf32>
    %80 = arith.truncf %79 : vector<8x8xf32> to vector<8x8xbf16>
    %cst_25 = arith.constant dense<0.000000e+00> : vector<8x8xf32>
    %81 = tpu.matmul %76, %78, %cst_25 {dimension_numbers = #tpu.dot_dimension_numbers<[1], [1], [0], [0], [0, 0, 1, 0], [], []>} : vector<8x8xbf16>, vector<8x8xbf16>, vector<8x8xf32> -> vector<8x8xf32>
    %cst_26 = arith.constant 0.353553385 : f32
    %82 = vector.broadcast %cst_26 : f32 to vector<8x8xf32>
    %83 = arith.mulf %81, %82 : vector<8x8xf32>
    %cst_27 = arith.constant dense<0xFF800000> : vector<8xf32>
    %84 = vector.multi_reduction <maximumf>, %83, %cst_27 [1] : vector<8x8xf32> to vector<8xf32>
    %85 = vector.shape_cast %84 : vector<8xf32> to vector<8x1xf32>
    %86 = vector.broadcast %85 : vector<8x1xf32> to vector<8x8xf32>
    %87 = arith.subf %83, %86 : vector<8x8xf32>
    %88 = math.exp %87 : vector<8x8xf32>
    %cst_28 = arith.constant dense<0.000000e+00> : vector<8xf32>
    %89 = vector.multi_reduction <add>, %88, %cst_28 [1] : vector<8x8xf32> to vector<8xf32>
    %90 = vector.shape_cast %89 : vector<8xf32> to vector<8x1xf32>
    %91 = tpu.reciprocal %90 {approx = true} : vector<8x1xf32> -> vector<8x1xf32>
    %92 = vector.broadcast %91 : vector<8x1xf32> to vector<8x8xf32>
    %93 = arith.mulf %88, %92 : vector<8x8xf32>
    %94 = arith.truncf %93 : vector<8x8xf32> to vector<8x8xbf16>
    %cst_29 = arith.constant dense<0.000000e+00> : vector<8x8xf32>
    %95 = tpu.matmul %94, %80, %cst_29 {dimension_numbers = #tpu.dot_dimension_numbers<[1], [0], [0], [1], [0, 0, 1, 1], [], []>} : vector<8x8xbf16>, vector<8x8xbf16>, vector<8x8xf32> -> vector<8x8xf32>
    %96 = vector.extract_strided_slice %30 {offsets = [0, 24], sizes = [8, 8], strides = [1, 1]} : vector<8x32xf32> to vector<8x8xf32>
    %97 = arith.truncf %96 : vector<8x8xf32> to vector<8x8xbf16>
    %98 = vector.extract_strided_slice %31 {offsets = [0, 24], sizes = [8, 8], strides = [1, 1]} : vector<8x32xf32> to vector<8x8xf32>
    %99 = arith.truncf %98 : vector<8x8xf32> to vector<8x8xbf16>
    %100 = vector.extract_strided_slice %32 {offsets = [0, 24], sizes = [8, 8], strides = [1, 1]} : vector<8x32xf32> to vector<8x8xf32>
    %101 = arith.truncf %100 : vector<8x8xf32> to vector<8x8xbf16>
    %cst_30 = arith.constant dense<0.000000e+00> : vector<8x8xf32>
    %102 = tpu.matmul %97, %99, %cst_30 {dimension_numbers = #tpu.dot_dimension_numbers<[1], [1], [0], [0], [0, 0, 1, 0], [], []>} : vector<8x8xbf16>, vector<8x8xbf16>, vector<8x8xf32> -> vector<8x8xf32>
    %cst_31 = arith.constant 0.353553385 : f32
    %103 = vector.broadcast %cst_31 : f32 to vector<8x8xf32>
    %104 = arith.mulf %102, %103 : vector<8x8xf32>
    %cst_32 = arith.constant dense<0xFF800000> : vector<8xf32>
    %105 = vector.multi_reduction <maximumf>, %104, %cst_32 [1] : vector<8x8xf32> to vector<8xf32>
    %106 = vector.shape_cast %105 : vector<8xf32> to vector<8x1xf32>
    %107 = vector.broadcast %106 : vector<8x1xf32> to vector<8x8xf32>
    %108 = arith.subf %104, %107 : vector<8x8xf32>
    %109 = math.exp %108 : vector<8x8xf32>
    %cst_33 = arith.constant dense<0.000000e+00> : vector<8xf32>
    %110 = vector.multi_reduction <add>, %109, %cst_33 [1] : vector<8x8xf32> to vector<8xf32>
    %111 = vector.shape_cast %110 : vector<8xf32> to vector<8x1xf32>
    %112 = tpu.reciprocal %111 {approx = true} : vector<8x1xf32> -> vector<8x1xf32>
    %113 = vector.broadcast %112 : vector<8x1xf32> to vector<8x8xf32>
    %114 = arith.mulf %109, %113 : vector<8x8xf32>
    %115 = arith.truncf %114 : vector<8x8xf32> to vector<8x8xbf16>
    %cst_34 = arith.constant dense<0.000000e+00> : vector<8x8xf32>
    %116 = tpu.matmul %115, %101, %cst_34 {dimension_numbers = #tpu.dot_dimension_numbers<[1], [0], [0], [1], [0, 0, 1, 1], [], []>} : vector<8x8xbf16>, vector<8x8xbf16>, vector<8x8xf32> -> vector<8x8xf32>
    %117 = tpu.concatenate %53, %74, %95, %116 in 1 : vector<8x8xf32>, vector<8x8xf32>, vector<8x8xf32>, vector<8x8xf32> -> vector<8x32xf32>
    %118 = arith.truncf %117 : vector<8x32xf32> to vector<8x32xbf16>
    %c0_35 = arith.constant 0 : index
    %c0_36 = arith.constant 0 : index
    %119 = vector.load %arg6[%c0_35, %c0_36] : memref<32x32xbf16, #tpu.memory_space<vmem>>, vector<32x32xbf16>
    %cst_37 = arith.constant dense<0.000000e+00> : vector<8x32xf32>
    %120 = tpu.matmul %118, %119, %cst_37 {dimension_numbers = #tpu.dot_dimension_numbers<[1], [1], [0], [0], [0, 0, 1, 0], [], []>} : vector<8x32xbf16>, vector<32x32xbf16>, vector<8x32xf32> -> vector<8x32xf32>
    %c0_38 = arith.constant 0 : index
    %c0_39 = arith.constant 0 : index
    %121 = vector.load %arg7[%c0_38, %c0_39] : memref<1x32xf32, #tpu.memory_space<vmem>>, vector<1x32xf32>
    %122 = vector.broadcast %121 : vector<1x32xf32> to vector<8x32xf32>
    %123 = arith.addf %120, %122 : vector<8x32xf32>
    %124 = arith.addf %1, %123 : vector<8x32xf32>
    %c0_40 = arith.constant 0 : index
    %c0_41 = arith.constant 0 : index
    %125 = vector.load %arg8[%c0_40, %c0_41] : memref<1x32xf32, #tpu.memory_space<vmem>>, vector<1x32xf32>
    %c0_42 = arith.constant 0 : index
    %c0_43 = arith.constant 0 : index
    %126 = vector.load %arg9[%c0_42, %c0_43] : memref<1x32xf32, #tpu.memory_space<vmem>>, vector<1x32xf32>
    %cst_44 = arith.constant dense<0.000000e+00> : vector<8xf32>
    %127 = vector.multi_reduction <add>, %124, %cst_44 [1] : vector<8x32xf32> to vector<8xf32>
    %128 = vector.shape_cast %127 : vector<8xf32> to vector<8x1xf32>
    %cst_45 = arith.constant 3.200000e+01 : f32
    %129 = vector.broadcast %cst_45 : f32 to vector<8x1xf32>
    %130 = arith.divf %128, %129 : vector<8x1xf32>
    %131 = vector.broadcast %130 : vector<8x1xf32> to vector<8x32xf32>
    %132 = arith.subf %124, %131 : vector<8x32xf32>
    %133 = arith.mulf %132, %132 : vector<8x32xf32>
    %cst_46 = arith.constant dense<0.000000e+00> : vector<8xf32>
    %134 = vector.multi_reduction <add>, %133, %cst_46 [1] : vector<8x32xf32> to vector<8xf32>
    %135 = vector.shape_cast %134 : vector<8xf32> to vector<8x1xf32>
    %cst_47 = arith.constant 3.200000e+01 : f32
    %136 = vector.broadcast %cst_47 : f32 to vector<8x1xf32>
    %137 = arith.divf %135, %136 : vector<8x1xf32>
    %cst_48 = arith.constant 9.99999974E-6 : f32
    %138 = vector.broadcast %cst_48 : f32 to vector<8x1xf32>
    %139 = arith.addf %137, %138 : vector<8x1xf32>
    %140 = math.rsqrt %139 : vector<8x1xf32>
    %141 = vector.broadcast %140 : vector<8x1xf32> to vector<8x32xf32>
    %142 = arith.mulf %132, %141 : vector<8x32xf32>
    %143 = vector.broadcast %125 : vector<1x32xf32> to vector<8x32xf32>
    %144 = arith.mulf %142, %143 : vector<8x32xf32>
    %145 = vector.broadcast %126 : vector<1x32xf32> to vector<8x32xf32>
    %146 = arith.addf %144, %145 : vector<8x32xf32>
    %147 = arith.truncf %146 : vector<8x32xf32> to vector<8x32xbf16>
    %c0_49 = arith.constant 0 : index
    %c0_50 = arith.constant 0 : index
    %148 = vector.load %arg10[%c0_49, %c0_50] : memref<128x32xbf16, #tpu.memory_space<vmem>>, vector<128x32xbf16>
    %cst_51 = arith.constant dense<0.000000e+00> : vector<8x128xf32>
    %149 = tpu.matmul %147, %148, %cst_51 {dimension_numbers = #tpu.dot_dimension_numbers<[1], [1], [0], [0], [0, 0, 1, 0], [], []>} : vector<8x32xbf16>, vector<128x32xbf16>, vector<8x128xf32> -> vector<8x128xf32>
    %c0_52 = arith.constant 0 : index
    %c0_53 = arith.constant 0 : index
    %150 = vector.load %arg11[%c0_52, %c0_53] : memref<1x128xf32, #tpu.memory_space<vmem>>, vector<1x128xf32>
    %151 = vector.broadcast %150 : vector<1x128xf32> to vector<8x128xf32>
    %152 = arith.addf %149, %151 : vector<8x128xf32>
    %cst_54 = arith.constant 1.702000e+00 : f32
    %153 = vector.broadcast %cst_54 : f32 to vector<8x128xf32>
    %154 = arith.mulf %153, %152 : vector<8x128xf32>
    %155 = arith.negf %154 : vector<8x128xf32>
    %156 = math.exp %155 : vector<8x128xf32>
    %cst_55 = arith.constant 1.000000e+00 : f32
    %157 = vector.broadcast %cst_55 : f32 to vector<8x128xf32>
    %158 = arith.addf %157, %156 : vector<8x128xf32>
    %159 = arith.divf %157, %158 : vector<8x128xf32>
    %160 = arith.mulf %152, %159 : vector<8x128xf32>
    %161 = arith.truncf %160 : vector<8x128xf32> to vector<8x128xbf16>
    %c0_56 = arith.constant 0 : index
    %c0_57 = arith.constant 0 : index
    %162 = vector.load %arg12[%c0_56, %c0_57] : memref<32x128xbf16, #tpu.memory_space<vmem>>, vector<32x128xbf16>
    %cst_58 = arith.constant dense<0.000000e+00> : vector<8x32xf32>
    %163 = tpu.matmul %161, %162, %cst_58 {dimension_numbers = #tpu.dot_dimension_numbers<[1], [1], [0], [0], [0, 0, 1, 0], [], []>} : vector<8x128xbf16>, vector<32x128xbf16>, vector<8x32xf32> -> vector<8x32xf32>
    %c0_59 = arith.constant 0 : index
    %c0_60 = arith.constant 0 : index
    %164 = vector.load %arg13[%c0_59, %c0_60] : memref<1x32xf32, #tpu.memory_space<vmem>>, vector<1x32xf32>
    %165 = vector.broadcast %164 : vector<1x32xf32> to vector<8x32xf32>
    %166 = arith.addf %163, %165 : vector<8x32xf32>
    %167 = arith.addf %124, %166 : vector<8x32xf32>
    %c0_61 = arith.constant 0 : index
    %c0_62 = arith.constant 0 : index
    %c0_63 = arith.constant 0 : index
    %168 = vector.load %arg14[%c0_61, %c0_62, %c0_63] : memref<1x8x32xf32, #tpu.memory_space<vmem>>, vector<1x8x32xf32>
    %169 = vector.shape_cast %168 : vector<1x8x32xf32> to vector<8x32xf32>
    %170 = vector.shape_cast %167 : vector<8x32xf32> to vector<1x8x32xf32>
    tpu.vector_store %arg14[%c0_61, %c0_62, %c0_63], %170 {strides = array<i32>} : memref<1x8x32xf32, #tpu.memory_space<vmem>>, vector<1x8x32xf32>,
    return
  }
  func.func @transform_0(%arg0: i32) -> (i32, i32, i32) {
    %c0_i32 = arith.constant 0 : i32
    %c0_i32_0 = arith.constant 0 : i32
    %c0_i32_1 = arith.constant 0 : i32
    return %arg0, %c0_i32, %c0_i32_0 : i32, i32, i32
  }
  func.func @transform_1(%arg0: i32) -> (i32, i32) {
    %c0_i32 = arith.constant 0 : i32
    %c0_i32_0 = arith.constant 0 : i32
    %c0_i32_1 = arith.constant 0 : i32
    return %c0_i32, %c0_i32_0 : i32, i32
  }
  func.func @transform_2(%arg0: i32) -> (i32, i32) {
    %c0_i32 = arith.constant 0 : i32
    %c0_i32_0 = arith.constant 0 : i32
    %c0_i32_1 = arith.constant 0 : i32
    return %c0_i32, %c0_i32_0 : i32, i32
  }
  func.func @transform_3(%arg0: i32) -> (i32, i32) {
    %c0_i32 = arith.constant 0 : i32
    %c0_i32_0 = arith.constant 0 : i32
    %c0_i32_1 = arith.constant 0 : i32
    return %c0_i32, %c0_i32_0 : i32, i32
  }
  func.func @transform_4(%arg0: i32) -> (i32, i32) {
    %c0_i32 = arith.constant 0 : i32
    %c0_i32_0 = arith.constant 0 : i32
    %c0_i32_1 = arith.constant 0 : i32
    return %c0_i32, %c0_i32_0 : i32, i32
  }
  func.func @transform_5(%arg0: i32) -> (i32, i32) {
    %c0_i32 = arith.constant 0 : i32
    %c0_i32_0 = arith.constant 0 : i32
    %c0_i32_1 = arith.constant 0 : i32
    return %c0_i32, %c0_i32_0 : i32, i32
  }
  func.func @transform_6(%arg0: i32) -> (i32, i32) {
    %c0_i32 = arith.constant 0 : i32
    %c0_i32_0 = arith.constant 0 : i32
    %c0_i32_1 = arith.constant 0 : i32
    return %c0_i32, %c0_i32_0 : i32, i32
  }
  func.func @transform_7(%arg0: i32) -> (i32, i32) {
    %c0_i32 = arith.constant 0 : i32
    %c0_i32_0 = arith.constant 0 : i32
    %c0_i32_1 = arith.constant 0 : i32
    return %c0_i32, %c0_i32_0 : i32, i32
  }
  func.func @transform_8(%arg0: i32) -> (i32, i32) {
    %c0_i32 = arith.constant 0 : i32
    %c0_i32_0 = arith.constant 0 : i32
    %c0_i32_1 = arith.constant 0 : i32
    return %c0_i32, %c0_i32_0 : i32, i32
  }
  func.func @transform_9(%arg0: i32) -> (i32, i32) {
    %c0_i32 = arith.constant 0 : i32
    %c0_i32_0 = arith.constant 0 : i32
    %c0_i32_1 = arith.constant 0 : i32
    return %c0_i32, %c0_i32_0 : i32, i32
  }
  func.func @transform_10(%arg0: i32) -> (i32, i32) {
    %c0_i32 = arith.constant 0 : i32
    %c0_i32_0 = arith.constant 0 : i32
    %c0_i32_1 = arith.constant 0 : i32
    return %c0_i32, %c0_i32_0 : i32, i32
  }
  func.func @transform_11(%arg0: i32) -> (i32, i32) {
    %c0_i32 = arith.constant 0 : i32
    %c0_i32_0 = arith.constant 0 : i32
    %c0_i32_1 = arith.constant 0 : i32
    return %c0_i32, %c0_i32_0 : i32, i32
  }
  func.func @transform_12(%arg0: i32) -> (i32, i32) {
    %c0_i32 = arith.constant 0 : i32
    %c0_i32_0 = arith.constant 0 : i32
    %c0_i32_1 = arith.constant 0 : i32
    return %c0_i32, %c0_i32_0 : i32, i32
  }
  func.func @transform_13(%arg0: i32) -> (i32, i32, i32) {
    %c0_i32 = arith.constant 0 : i32
    %c0_i32_0 = arith.constant 0 : i32
    %c0_i32_1 = arith.constant 0 : i32
    return %arg0, %c0_i32, %c0_i32_0 : i32, i32, i32
  }
}

</mosaic_0001>

<llo_original>
// kernel: residual_attention_block.1
$region0: #{residual_attention_block.1}
  #allocation0 [shape = 'u32[]', space=smem, size = 0x4, offset = 0x4, fixed_abs, tag = 'smem constant byte address 0x4 - core index']
  #allocation1 [shape = 'u32[144,128]{1,0:T(1,128)}', space=vmem, size = 0x12000, scoped, tag = 'internal scratch']
  %s0 = inlined_call_operand.vmem [shape: f32[2,8,32], index: 0, kind: input, shape index: {}]
  %s1 = inlined_call_operand.vmem [shape: f32[1,32], index: 1, kind: input, shape index: {}]
  %s2 = inlined_call_operand.vmem [shape: f32[1,32], index: 2, kind: input, shape index: {}]
  %s3 = inlined_call_operand.vmem [shape: bf16[96,32], index: 3, kind: input, shape index: {}]
  %s4 = inlined_call_operand.vmem [shape: f32[1,96], index: 4, kind: input, shape index: {}]
  %s5 = inlined_call_operand.vmem [shape: bf16[32,32], index: 5, kind: input, shape index: {}]
  %s6 = inlined_call_operand.vmem [shape: f32[1,32], index: 6, kind: input, shape index: {}]
  %s7 = inlined_call_operand.vmem [shape: f32[1,32], index: 7, kind: input, shape index: {}]
  %s8 = inlined_call_operand.vmem [shape: f32[1,32], index: 8, kind: input, shape index: {}]
  %s9 = inlined_call_operand.vmem [shape: bf16[128,32], index: 9, kind: input, shape index: {}]
  %s10 = inlined_call_operand.vmem [shape: f32[1,128], index: 10, kind: input, shape index: {}]
  %s11 = inlined_call_operand.vmem [shape: bf16[32,128], index: 11, kind: input, shape index: {}]
  %s12 = inlined_call_operand.vmem [shape: f32[1,32], index: 12, kind: input, shape index: {}]
  %s13 = inlined_call_operand.vmem [shape: f32[2,8,32], index: 13, kind: output, shape index: {}]
  %s14 = sld [smem:[#allocation0]]
  $region85: #{residual_attention_block.1} parent=0
    _
  %s16 = ssub.s32 1, %s14
  %s17 = scalar_select 0, %s16, %s14
  loop: start=0, step=1, limit=4
  $region2: #{residual_attention_block.1} parent=0 // loop_pre_header
    _
  $region3: #{residual_attention_block.1} parent=0 // loop_header
    %s19 = sphi 0, %s23
    %p20 = scmp.ge.s32.totalorder %s19, 4
    %s29 = sphi 0, %s31
    %s32 = sphi 0, %s29
    %s33 = sphi 0, %s32
    %s49 = sphi 0, %s33
    %s53 = sphi 0, %s53
    %s55 = sphi 0, %s53
    %s56 = sphi 0, %s55
    %s70 = sphi 0, %s56
    %s74 = sphi 0, %s74
    %s76 = sphi 0, %s74
    %s77 = sphi 0, %s76
    %s91 = sphi 0, %s77
    %s95 = sphi 0, %s95
    %s97 = sphi 0, %s95
    %s98 = sphi 0, %s97
    %s112 = sphi 0, %s98
    %s116 = sphi 0, %s116
    %s118 = sphi 0, %s116
    %s119 = sphi 0, %s118
    %s133 = sphi 0, %s119
    %s137 = sphi 0, %s137
    %s139 = sphi 0, %s137
    %s140 = sphi 0, %s139
    %s154 = sphi 0, %s140
    %s158 = sphi 0, %s158
    %s160 = sphi 0, %s158
    %s161 = sphi 0, %s160
    %s175 = sphi 0, %s161
    %s179 = sphi 0, %s179
    %s181 = sphi 0, %s179
    %s182 = sphi 0, %s181
    %s196 = sphi 0, %s182
    %s200 = sphi 0, %s200
    %s202 = sphi 0, %s200
    %s203 = sphi 0, %s202
    %s217 = sphi 0, %s203
    %s221 = sphi 0, %s221
    %s223 = sphi 0, %s221
    %s224 = sphi 0, %s223
    %s238 = sphi 0, %s224
    %s242 = sphi 0, %s242
    %s244 = sphi 0, %s242
    %s245 = sphi 0, %s244
    %s259 = sphi 0, %s245
    %s263 = sphi 0, %s263
    %s265 = sphi 0, %s263
    %s266 = sphi 0, %s265
    %s280 = sphi 0, %s266
    %s284 = sphi 0, %s284
    %s286 = sphi 0, %s284
    %s287 = sphi 0, %s286
    %s301 = sphi 0, %s287
    %s307 = sphi 0, %s309
    %s310 = sphi 0, %s307
    %s311 = sphi 0, %s310
    %s327 = sphi 0, %s311
  $region4: #{residual_attention_block.1} parent=0 // loop_header_branch
    %22 = sbr.rel (%p20) target = $region8
  $region5: #{residual_attention_block.1} parent=0 // loop_body
    %s24 = ssub.s32 %s19, 1
    %s25 = ssub.s32 %s19, 2
    %s26 = sadd.s32 %s19, 1
    %s27 = ssub.s32 %s19, %s26
    %p28 = scmp.eq.s32.totalorder %s27, 0
    %s30 = sadd.s32 %s29, 1
    %s31 = scalar_select %p28, %s29, %s30
    %p34 = pneg %p28
    %p35 = scmp.eq.s32.totalorder %s19, 1
    %p36 = por %p34, %p35
    %p37 = scmp.ne.s32.totalorder %s29, %s32
    %p38 = scmp.eq.s32.totalorder %s19, 0
    %p39 = por %p37, %p38
    %p40 = scmp.ne.s32.totalorder %s29, %s32
    %p41 = scmp.eq.s32.totalorder %s24, 1
    %p42 = por %p40, %p41
    %p43 = scmp.ne.s32.totalorder %s32, %s33
    %p44 = scmp.eq.s32.totalorder %s24, 0
    %p45 = por %p43, %p44
    %p46 = scmp.ne.s32.totalorder %s32, %s33
    %p47 = scmp.eq.s32.totalorder %s25, 1
    %p48 = por %p46, %p47
    %p50 = scmp.ne.s32.totalorder %s33, %s49
    %p51 = scmp.eq.s32.totalorder %s25, 0
    %p52 = por %p50, %p51
    %s54 = sadd.s32 %s53, 1
    %p57 = scmp.eq.s32.totalorder %s19, 1
    %p58 = scmp.ne.s32.totalorder %s53, %s55
    %p59 = scmp.eq.s32.totalorder %s19, 0
    %p60 = por %p58, %p59
    %p61 = scmp.ne.s32.totalorder %s53, %s55
    %p62 = scmp.eq.s32.totalorder %s24, 1
    %p63 = por %p61, %p62
    %p64 = scmp.ne.s32.totalorder %s55, %s56
    %p65 = scmp.eq.s32.totalorder %s24, 0
    %p66 = por %p64, %p65
    %p67 = scmp.ne.s32.totalorder %s55, %s56
    %p68 = scmp.eq.s32.totalorder %s25, 1
    %p69 = por %p67, %p68
    %p71 = scmp.ne.s32.totalorder %s56, %s70
    %p72 = scmp.eq.s32.totalorder %s25, 0
    %p73 = por %p71, %p72
    %s75 = sadd.s32 %s74, 1
    %p78 = scmp.eq.s32.totalorder %s19, 1
    %p79 = scmp.ne.s32.totalorder %s74, %s76
    %p80 = scmp.eq.s32.totalorder %s19, 0
    %p81 = por %p79, %p80
    %p82 = scmp.ne.s32.totalorder %s74, %s76
    %p83 = scmp.eq.s32.totalorder %s24, 1
    %p84 = por %p82, %p83
    %p85 = scmp.ne.s32.totalorder %s76, %s77
    %p86 = scmp.eq.s32.totalorder %s24, 0
    %p87 = por %p85, %p86
    %p88 = scmp.ne.s32.totalorder %s76, %s77
    %p89 = scmp.eq.s32.totalorder %s25, 1
    %p90 = por %p88, %p89
    %p92 = scmp.ne.s32.totalorder %s77, %s91
    %p93 = scmp.eq.s32.totalorder %s25, 0
    %p94 = por %p92, %p93
    %s96 = sadd.s32 %s95, 1
    %p99 = scmp.eq.s32.totalorder %s19, 1
    %p100 = scmp.ne.s32.totalorder %s95, %s97
    %p101 = scmp.eq.s32.totalorder %s19, 0
    %p102 = por %p100, %p101
    %p103 = scmp.ne.s32.totalorder %s95, %s97
    %p104 = scmp.eq.s32.totalorder %s24, 1
    %p105 = por %p103, %p104
    %p106 = scmp.ne.s32.totalorder %s97, %s98
    %p107 = scmp.eq.s32.totalorder %s24, 0
    %p108 = por %p106, %p107
    %p109 = scmp.ne.s32.totalorder %s97, %s98
    %p110 = scmp.eq.s32.totalorder %s25, 1
    %p111 = por %p109, %p110
    %p113 = scmp.ne.s32.totalorder %s98, %s112
    %p114 = scmp.eq.s32.totalorder %s25, 0
    %p115 = por %p113, %p114
    %s117 = sadd.s32 %s116, 1
    %p120 = scmp.eq.s32.totalorder %s19, 1
    %p121 = scmp.ne.s32.totalorder %s116, %s118
    %p122 = scmp.eq.s32.totalorder %s19, 0
    %p123 = por %p121, %p122
    %p124 = scmp.ne.s32.totalorder %s116, %s118
    %p125 = scmp.eq.s32.totalorder %s24, 1
    %p126 = por %p124, %p125
    %p127 = scmp.ne.s32.totalorder %s118, %s119
    %p128 = scmp.eq.s32.totalorder %s24, 0
    %p129 = por %p127, %p128
    %p130 = scmp.ne.s32.totalorder %s118, %s119
    %p131 = scmp.eq.s32.totalorder %s25, 1
    %p132 = por %p130, %p131
    %p134 = scmp.ne.s32.totalorder %s119, %s133
    %p135 = scmp.eq.s32.totalorder %s25, 0
    %p136 = por %p134, %p135
    %s138 = sadd.s32 %s137, 1
    %p141 = scmp.eq.s32.totalorder %s19, 1
    %p142 = scmp.ne.s32.totalorder %s137, %s139
    %p143 = scmp.eq.s32.totalorder %s19, 0
    %p144 = por %p142, %p143
    %p145 = scmp.ne.s32.totalorder %s137, %s139
    %p146 = scmp.eq.s32.totalorder %s24, 1
    %p147 = por %p145, %p146
    %p148 = scmp.ne.s32.totalorder %s139, %s140
    %p149 = scmp.eq.s32.totalorder %s24, 0
    %p150 = por %p148, %p149
    %p151 = scmp.ne.s32.totalorder %s139, %s140
    %p152 = scmp.eq.s32.totalorder %s25, 1
    %p153 = por %p151, %p152
    %p155 = scmp.ne.s32.totalorder %s140, %s154
    %p156 = scmp.eq.s32.totalorder %s25, 0
    %p157 = por %p155, %p156
    %s159 = sadd.s32 %s158, 1
    %p162 = scmp.eq.s32.totalorder %s19, 1
    %p163 = scmp.ne.s32.totalorder %s158, %s160
    %p164 = scmp.eq.s32.totalorder %s19, 0
    %p165 = por %p163, %p164
    %p166 = scmp.ne.s32.totalorder %s158, %s160
    %p167 = scmp.eq.s32.totalorder %s24, 1
    %p168 = por %p166, %p167
    %p169 = scmp.ne.s32.totalorder %s160, %s161
    %p170 = scmp.eq.s32.totalorder %s24, 0
    %p171 = por %p169, %p170
    %p172 = scmp.ne.s32.totalorder %s160, %s161
    %p173 = scmp.eq.s32.totalorder %s25, 1
    %p174 = por %p172, %p173
    %p176 = scmp.ne.s32.totalorder %s161, %s175
    %p177 = scmp.eq.s32.totalorder %s25, 0
    %p178 = por %p176, %p177
    %s180 = sadd.s32 %s179, 1
    %p183 = scmp.eq.s32.totalorder %s19, 1
    %p184 = scmp.ne.s32.totalorder %s179, %s181
    %p185 = scmp.eq.s32.totalorder %s19, 0
    %p186 = por %p184, %p185
    %p187 = scmp.ne.s32.totalorder %s179, %s181
    %p188 = scmp.eq.s32.totalorder %s24, 1
    %p189 = por %p187, %p188
    %p190 = scmp.ne.s32.totalorder %s181, %s182
    %p191 = scmp.eq.s32.totalorder %s24, 0
    %p192 = por %p190, %p191
    %p193 = scmp.ne.s32.totalorder %s181, %s182
    %p194 = scmp.eq.s32.totalorder %s25, 1
    %p195 = por %p193, %p194
    %p197 = scmp.ne.s32.totalorder %s182, %s196
    %p198 = scmp.eq.s32.totalorder %s25, 0
    %p199 = por %p197, %p198
    %s201 = sadd.s32 %s200, 1
    %p204 = scmp.eq.s32.totalorder %s19, 1
    %p205 = scmp.ne.s32.totalorder %s200, %s202
    %p206 = scmp.eq.s32.totalorder %s19, 0
    %p207 = por %p205, %p206
    %p208 = scmp.ne.s32.totalorder %s200, %s202
    %p209 = scmp.eq.s32.totalorder %s24, 1
    %p210 = por %p208, %p209
    %p211 = scmp.ne.s32.totalorder %s202, %s203
    %p212 = scmp.eq.s32.totalorder %s24, 0
    %p213 = por %p211, %p212
    %p214 = scmp.ne.s32.totalorder %s202, %s203
    %p215 = scmp.eq.s32.totalorder %s25, 1
    %p216 = por %p214, %p215
    %p218 = scmp.ne.s32.totalorder %s203, %s217
    %p219 = scmp.eq.s32.totalorder %s25, 0
    %p220 = por %p218, %p219
    %s222 = sadd.s32 %s221, 1
    %p225 = scmp.eq.s32.totalorder %s19, 1
    %p226 = scmp.ne.s32.totalorder %s221, %s223
    %p227 = scmp.eq.s32.totalorder %s19, 0
    %p228 = por %p226, %p227
    %p229 = scmp.ne.s32.totalorder %s221, %s223
    %p230 = scmp.eq.s32.totalorder %s24, 1
    %p231 = por %p229, %p230
    %p232 = scmp.ne.s32.totalorder %s223, %s224
    %p233 = scmp.eq.s32.totalorder %s24, 0
    %p234 = por %p232, %p233
    %p235 = scmp.ne.s32.totalorder %s223, %s224
    %p236 = scmp.eq.s32.totalorder %s25, 1
    %p237 = por %p235, %p236
    %p239 = scmp.ne.s32.totalorder %s224, %s238
    %p240 = scmp.eq.s32.totalorder %s25, 0
    %p241 = por %p239, %p240
    %s243 = sadd.s32 %s242, 1
    %p246 = scmp.eq.s32.totalorder %s19, 1
    %p247 = scmp.ne.s32.totalorder %s242, %s244
    %p248 = scmp.eq.s32.totalorder %s19, 0
    %p249 = por %p247, %p248
    %p250 = scmp.ne.s32.totalorder %s242, %s244
    %p251 = scmp.eq.s32.totalorder %s24, 1
    %p252 = por %p250, %p251
    %p253 = scmp.ne.s32.totalorder %s244, %s245
    %p254 = scmp.eq.s32.totalorder %s24, 0
    %p255 = por %p253, %p254
    %p256 = scmp.ne.s32.totalorder %s244, %s245
    %p257 = scmp.eq.s32.totalorder %s25, 1
    %p258 = por %p256, %p257
    %p260 = scmp.ne.s32.totalorder %s245, %s259
    %p261 = scmp.eq.s32.totalorder %s25, 0
    %p262 = por %p260, %p261
    %s264 = sadd.s32 %s263, 1
    %p267 = scmp.eq.s32.totalorder %s19, 1
    %p268 = scmp.ne.s32.totalorder %s263, %s265
    %p269 = scmp.eq.s32.totalorder %s19, 0
    %p270 = por %p268, %p269
    %p271 = scmp.ne.s32.totalorder %s263, %s265
    %p272 = scmp.eq.s32.totalorder %s24, 1
    %p273 = por %p271, %p272
    %p274 = scmp.ne.s32.totalorder %s265, %s266
    %p275 = scmp.eq.s32.totalorder %s24, 0
    %p276 = por %p274, %p275
    %p277 = scmp.ne.s32.totalorder %s265, %s266
    %p278 = scmp.eq.s32.totalorder %s25, 1
    %p279 = por %p277, %p278
    %p281 = scmp.ne.s32.totalorder %s266, %s280
    %p282 = scmp.eq.s32.totalorder %s25, 0
    %p283 = por %p281, %p282
    %s285 = sadd.s32 %s284, 1
    %p288 = scmp.eq.s32.totalorder %s19, 1
    %p289 = scmp.ne.s32.totalorder %s284, %s286
    %p290 = scmp.eq.s32.totalorder %s19, 0
    %p291 = por %p289, %p290
    %p292 = scmp.ne.s32.totalorder %s284, %s286
    %p293 = scmp.eq.s32.totalorder %s24, 1
    %p294 = por %p292, %p293
    %p295 = scmp.ne.s32.totalorder %s286, %s287
    %p296 = scmp.eq.s32.totalorder %s24, 0
    %p297 = por %p295, %p296
    %p298 = scmp.ne.s32.totalorder %s286, %s287
    %p299 = scmp.eq.s32.totalorder %s25, 1
    %p300 = por %p298, %p299
    %p302 = scmp.ne.s32.totalorder %s287, %s301
    %p303 = scmp.eq.s32.totalorder %s25, 0
    %p304 = por %p302, %p303
    %s305 = ssub.s32 %s19, %s26
    %p306 = scmp.eq.s32.totalorder %s305, 0
    %s308 = sadd.s32 %s307, 1
    %s309 = scalar_select %p306, %s307, %s308
    %p312 = pneg %p306
    %p313 = scmp.eq.s32.totalorder %s19, 1
    %p314 = por %p312, %p313
    %p315 = scmp.ne.s32.totalorder %s307, %s310
    %p316 = scmp.eq.s32.totalorder %s19, 0
    %p317 = por %p315, %p316
    %p318 = scmp.ne.s32.totalorder %s307, %s310
    %p319 = scmp.eq.s32.totalorder %s24, 1
    %p320 = por %p318, %p319
    %p321 = scmp.ne.s32.totalorder %s310, %s311
    %p322 = scmp.eq.s32.totalorder %s24, 0
    %p323 = por %p321, %p322
    %p324 = scmp.ne.s32.totalorder %s310, %s311
    %p325 = scmp.eq.s32.totalorder %s25, 1
    %p326 = por %p324, %p325
    %p328 = scmp.ne.s32.totalorder %s311, %s327
    %p329 = scmp.eq.s32.totalorder %s25, 0
    %p330 = por %p328, %p329
    %p331 = scmp.le.s32.totalorder 1, %s19
    %p332 = scmp.lt.s32.totalorder %s19, 3
    %p333 = pnand %p331, %p332
    %p334 = pneg %p333
    // Predicated region
    $region9: #{residual_attention_block.1} parent=5 // pred_check
      _
    $region10: #{residual_attention_block.1} parent=5 // pred_check_branch
      %336 = sbr.rel (%p333) target = $region12
    $region11: #{residual_attention_block.1} parent=5 // pred_region
      %s337 = ssub.s32 %s19, 1
      // Predicated region
      $region13: #{residual_attention_block.1} parent=11 // pred_check
        %p338 = pneg %p66
      $region14: #{residual_attention_block.1} parent=11 // pred_check_branch
        %340 = sbr.rel (%p338) target = $region16
      $region15: #{residual_attention_block.1} parent=11 // pred_region
        _
      $region16: #{residual_attention_block.1} parent=11 // pred_fallthru
        _
      // Predicated region
      $region17: #{residual_attention_block.1} parent=11 // pred_check
        %p341 = pneg %p87
      $region18: #{residual_attention_block.1} parent=11 // pred_check_branch
        %343 = sbr.rel (%p341) target = $region20
      $region19: #{residual_attention_block.1} parent=11 // pred_region
        _
      $region20: #{residual_attention_block.1} parent=11 // pred_fallthru
        _
      // Predicated region
      $region21: #{residual_attention_block.1} parent=11 // pred_check
        %p344 = pneg %p108
      $region22: #{residual_attention_block.1} parent=11 // pred_check_branch
        %346 = sbr.rel (%p344) target = $region24
      $region23: #{residual_attention_block.1} parent=11 // pred_region
        _
      $region24: #{residual_attention_block.1} parent=11 // pred_fallthru
        _
      // Predicated region
      $region25: #{residual_attention_block.1} parent=11 // pred_check
        %p347 = pneg %p129
      $region26: #{residual_attention_block.1} parent=11 // pred_check_branch
        %349 = sbr.rel (%p347) target = $region28
      $region27: #{residual_attention_block.1} parent=11 // pred_region
        _
      $region28: #{residual_attention_block.1} parent=11 // pred_fallthru
        _
      // Predicated region
      $region29: #{residual_attention_block.1} parent=11 // pred_check
        %p350 = pneg %p150
      $region30: #{residual_attention_block.1} parent=11 // pred_check_branch
        %352 = sbr.rel (%p350) target = $region32
      $region31: #{residual_attention_block.1} parent=11 // pred_region
        _
      $region32: #{residual_attention_block.1} parent=11 // pred_fallthru
        _
      // Predicated region
      $region33: #{residual_attention_block.1} parent=11 // pred_check
        %p353 = pneg %p171
      $region34: #{residual_attention_block.1} parent=11 // pred_check_branch
        %355 = sbr.rel (%p353) target = $region36
      $region35: #{residual_attention_block.1} parent=11 // pred_region
        _
      $region36: #{residual_attention_block.1} parent=11 // pred_fallthru
        _
      // Predicated region
      $region37: #{residual_attention_block.1} parent=11 // pred_check
        %p356 = pneg %p192
      $region38: #{residual_attention_block.1} parent=11 // pred_check_branch
        %358 = sbr.rel (%p356) target = $region40
      $region39: #{residual_attention_block.1} parent=11 // pred_region
        _
      $region40: #{residual_attention_block.1} parent=11 // pred_fallthru
        _
      // Predicated region
      $region41: #{residual_attention_block.1} parent=11 // pred_check
        %p359 = pneg %p213
      $region42: #{residual_attention_block.1} parent=11 // pred_check_branch
        %361 = sbr.rel (%p359) target = $region44
      $region43: #{residual_attention_block.1} parent=11 // pred_region
        _
      $region44: #{residual_attention_block.1} parent=11 // pred_fallthru
        _
      // Predicated region
      $region45: #{residual_attention_block.1} parent=11 // pred_check
        %p362 = pneg %p234
      $region46: #{residual_attention_block.1} parent=11 // pred_check_branch
        %364 = sbr.rel (%p362) target = $region48
      $region47: #{residual_attention_block.1} parent=11 // pred_region
        _
      $region48: #{residual_attention_block.1} parent=11 // pred_fallthru
        _
      // Predicated region
      $region49: #{residual_attention_block.1} parent=11 // pred_check
        %p365 = pneg %p255
      $region50: #{residual_attention_block.1} parent=11 // pred_check_branch
        %367 = sbr.rel (%p365) target = $region52
      $region51: #{residual_attention_block.1} parent=11 // pred_region
        _
      $region52: #{residual_attention_block.1} parent=11 // pred_fallthru
        _
      // Predicated region
      $region53: #{residual_attention_block.1} parent=11 // pred_check
        %p368 = pneg %p276
      $region54: #{residual_attention_block.1} parent=11 // pred_check_branch
        %370 = sbr.rel (%p368) target = $region56
      $region55: #{residual_attention_block.1} parent=11 // pred_region
        _
      $region56: #{residual_attention_block.1} parent=11 // pred_fallthru
        _
      // Predicated region
      $region57: #{residual_attention_block.1} parent=11 // pred_check
        %p371 = pneg %p297
      $region58: #{residual_attention_block.1} parent=11 // pred_check_branch
        %373 = sbr.rel (%p371) target = $region60
      $region59: #{residual_attention_block.1} parent=11 // pred_region
        _
      $region60: #{residual_attention_block.1} parent=11 // pred_fallthru
        _
    $region12: #{residual_attention_block.1} parent=5 // pred_fallthru
      _
    %p374 = scmp.lt.s32.totalorder %s19, 2
    // Predicated region
    $region61: #{residual_attention_block.1} parent=5 // pred_check
      %p375 = pneg %p374
    $region62: #{residual_attention_block.1} parent=5 // pred_check_branch
      %377 = sbr.rel (%p375) target = $region64
    $region63: #{residual_attention_block.1} parent=5 // pred_region
      // Predicated region
      $region65: #{residual_attention_block.1} parent=63 // pred_check
        %p378 = pneg %p39
      $region66: #{residual_attention_block.1} parent=63 // pred_check_branch
        %380 = sbr.rel (%p378) target = $region68
      $region67: #{residual_attention_block.1} parent=63 // pred_region
        %p381 = scmp.lt.s32.totalorder %s19, 1
        %s382 = scalar_select %p381, %s19, 1
        %s383 = smul.addr %s382, 8
        %s384 = scalar_lea.vmem %s0, %s383
      $region68: #{residual_attention_block.1} parent=63 // pred_fallthru
        _
    $region64: #{residual_attention_block.1} parent=5 // pred_fallthru
      _
    %p385 = scmp.le.s32.totalorder 1, %s19
    %p386 = scmp.lt.s32.totalorder %s19, 3
    %p387 = pnand %p385, %p386
    %p388 = pneg %p387
    // Predicated region
    $region69: #{residual_attention_block.1} parent=5 // pred_check
      _
    $region70: #{residual_attention_block.1} parent=5 // pred_check_branch
      %390 = sbr.rel (%p387) target = $region72
    $region71: #{residual_attention_block.1} parent=5 // pred_region
      %s391 = ssub.s32 %s19, 1
      %p392 = scmp.lt.s32.totalorder %s24, 1
      %s393 = scalar_select %p392, %s24, 1
      %s394 = smul.addr %s393, 8
      %s395 = scalar_lea.vmem %s0, %s394
      %p396 = pneg %p45
      %p397 = pneg %p42
      %p398 = pneg %p66
      %p399 = pneg %p63
      %p400 = pneg %p87
      %p401 = pneg %p84
      %p402 = pneg %p108
      %p403 = pneg %p105
      %p404 = pneg %p129
      %p405 = pneg %p126
      %p406 = pneg %p150
      %p407 = pneg %p147
      %p408 = pneg %p171
      %p409 = pneg %p168
      %p410 = pneg %p192
      %p411 = pneg %p189
      %p412 = pneg %p213
      %p413 = pneg %p210
      %p414 = pneg %p234
      %p415 = pneg %p231
      %p416 = pneg %p255
      %p417 = pneg %p252
      %p418 = pneg %p276
      %p419 = pneg %p273
      %p420 = pneg %p297
      %p421 = pneg %p294
      %p422 = pneg %p323
      %p423 = pneg %p320
      %p424 = scmp.lt.s32.totalorder %s24, 1
      %s425 = scalar_select %p424, %s24, 1
      %s426 = smul.addr %s425, 8
      %s427 = scalar_lea.vmem %s13, %s426
      %p428 = scmp.lt.s32.totalorder %s24, 1
      %s429 = scalar_select %p428, %s24, 1
      %s430 = smul.addr %s429, 8
      %s431 = scalar_lea.vmem %s0, %s430
      %p432 = scmp.lt.s32.totalorder %s24, 1
      %s433 = scalar_select %p432, %s24, 1
      %s434 = smul.addr %s433, 8
      %s435 = scalar_lea.vmem %s13, %s434
      %v437 = vld [vmem:[%s431] sm:$0xff]
      %v438 = vld [vmem:[%s1] sm:$0x1]
      %v439 = vld [vmem:[%s2] sm:$0x1]
      %vm440 = vcmask 261120
      %v441 = vsel %vm440, %v437, 0.0
      %442 = vadd.xlane.f32.xlu0 %v441
      %v443 = vpop.xlane.xlu0 %442
      %v444 = vrcp.pop 32.0
      %v445 = vmul.f32 %v443, %v444
      %v446 = vsub.f32 %v437, %v445
      %v447 = vmul.f32 %v446, %v446
      %v448 = vsel %vm440, %v447, 0.0
      %449 = vadd.xlane.f32.xlu0 %v448
      %v450 = vpop.xlane.xlu0 %449
      %v451 = vmul.f32 %v450, %v444
      %v452 = vadd.f32 %v451, 1e-05
      %v453 = vrsqrt.pop %v452
      %v454 = vmul.f32 %v446, %v453
      %v456 = vlaneseq
      %v457 = vshrl.u32 %v456, 7
      %v458 = vsub.s32 0, %v457
      %v459 = vrot.slane %v438, %v458
      %v461 = vmul.f32 %v454, %v459
      %v463 = vlaneseq
      %v464 = vshrl.u32 %v463, 7
      %v465 = vsub.s32 0, %v464
      %v466 = vrot.slane %v439, %v465
      %v468 = vadd.f32 %v461, %v466
      %v469 = vpack.c.bf16 %v468, %v468
      %v470 = vld [vmem:[%s3] sm:$0xf]
      %v471 = vld [vmem:[%s3 + $0x4] sm:$0xf]
      %v472 = vld [vmem:[%s3 + $0x8] sm:$0xf]
      %v473 = vld [vmem:[%s3 + $0xc] sm:$0xf]
      %v474 = vld [vmem:[%s3 + $0x10] sm:$0xf]
      %v475 = vld [vmem:[%s3 + $0x14] sm:$0xf]
      %v476 = vld [vmem:[%s3 + $0x18] sm:$0xf]
      %v477 = vld [vmem:[%s3 + $0x1c] sm:$0xf]
      %v478 = vld [vmem:[%s3 + $0x20] sm:$0xf]
      %v479 = vld [vmem:[%s3 + $0x24] sm:$0xf]
      %v480 = vld [vmem:[%s3 + $0x28] sm:$0xf]
      %v481 = vld [vmem:[%s3 + $0x2c] sm:$0xf]
      %v482 = vld [vmem:[%s4] sm:$0x1]
      %v484 = vlaneseq
      %v485 = vshrl.u32 %v484, 7
      %v486 = vsub.s32 0, %v485
      %v487 = vrot.slane %v482, %v486
      %v501 = vunpack.c.l.b16 %v470
      %v502 = vunpack.c.l.b16 %v471
      %v503 = vunpack.c.l.b16 %v472
      %v504 = vunpack.c.l.b16 %v473
      %v505 = vunpack.c.l.b16 %v474
      %v506 = vunpack.c.l.b16 %v475
      %v507 = vunpack.c.l.b16 %v476
      %v508 = vunpack.c.l.b16 %v477
      %v509 = vunpack.c.l.b16 %v478
      %v510 = vunpack.c.l.b16 %v479
      %v511 = vunpack.c.l.b16 %v480
      %v512 = vunpack.c.l.b16 %v481
      %v513 = vpack.c.b16 %v502, %v501
      %v514 = vpack.c.b16 %v504, %v503
      %v515 = vpack.c.b16 %v506, %v505
      %v516 = vpack.c.b16 %v508, %v507
      %v517 = vpack.c.b16 %v510, %v509
      %v518 = vpack.c.b16 %v512, %v511
      %v520 = vsel %vm440, %v469, 0
      %v523 = vsel %vm440, %v513, 0
      %v526 = vsel %vm440, %v514, 0
      %v529 = vsel %vm440, %v515, 0
      %v532 = vsel %vm440, %v516, 0
      %v535 = vsel %vm440, %v517, 0
      %v538 = vsel %vm440, %v518, 0
      %540 = vmatprep.subr.bf16.mxu0 0
      %541 = vmatpush1.bf16.xpose.msra.mxu0 0
      %542 = vmatprep.subr.bf16.mxu0 0
      %543 = vmatpush1.bf16.xpose.msra.mxu0 0
      %544 = vmatprep.subr.bf16.mxu0 0
      %545 = vmatpush1.bf16.xpose.msra.mxu0 %v538
      %546 = vmatprep.subr.bf16.mxu0 0
      %547 = vmatpush1.bf16.xpose.msra.mxu0 %v535
      %548 = vmatprep.subr.bf16.mxu0 0
      %549 = vmatpush1.bf16.xpose.msra.mxu0 %v532
      %550 = vmatprep.subr.bf16.mxu0 0
      %551 = vmatpush1.bf16.xpose.msra.mxu0 %v529
      %552 = vmatprep.subr.bf16.mxu0 0
      %553 = vmatpush1.bf16.xpose.msra.mxu0 %v526
      %554 = vmatprep.subr.bf16.mxu0 0
      %555 = vmatpush1.bf16.xpose.msra.mxu0 %v523
      %556 = vmatprep.subr.bf16.mxu0 0
      %557 = vmatpush2.bf16.xpose.msra.mxu0 0
      %558 = vmatprep.subr.bf16.mxu0 0
      %559 = vmatpush2.bf16.xpose.msra.mxu0 0
      %560 = vmatprep.subr.bf16.mxu0 0
      %561 = vmatpush2.bf16.xpose.msra.mxu0 0
      %562 = vmatprep.subr.bf16.mxu0 0
      %563 = vmatpush2.bf16.xpose.msra.mxu0 0
      %564 = vmatprep.subr.bf16.mxu0 0
      %565 = vmatpush2.bf16.xpose.msra.mxu0 0
      %566 = vmatprep.subr.bf16.mxu0 0
      %567 = vmatpush2.bf16.xpose.msra.mxu0 0
      %568 = vmatprep.subr.bf16.mxu0 0
      %569 = vmatpush2.bf16.xpose.msra.mxu0 0
      %570 = vmatprep.subr.bf16.mxu0 0
      %571 = vmatpush2.bf16.xpose.msra.mxu0 0
      %572 = vmatprep.mubr.bf16.mxu0 0
      %573 = vmatmul.mubr.bf16.gmra.mxu0 %v520
      %v574 = vpop.f32.mrf.mxu0
      %v575 = vadd.f32 %v487, %v574
      %v576 = vpop.f32.mrf.mxu0
      %v577 = vpop.f32.mrf.mxu0
      %v578 = vpop.f32.mrf.mxu0
      %579 = vdwg.mxu0
      %v580 = vpack.c.bf16 %v575, %v575
      %582 = vrot.lane.b32.xlu0 %v580, 96
      %v583 = vpop.permute.xlu0 %582
      %vm584 = vcmask 64512
      %v586 = vsel %vm584, %v580, 0
      %v589 = vsel %vm584, %v583, 0
      %591 = vmatprep.subr.bf16.mxu0 0
      %592 = vmatpush1.bf16.xpose.msra.mxu0 0
      %593 = vmatprep.subr.bf16.mxu0 0
      %594 = vmatpush1.bf16.xpose.msra.mxu0 0
      %595 = vmatprep.subr.bf16.mxu0 0
      %596 = vmatpush1.bf16.xpose.msra.mxu0 0
      %597 = vmatprep.subr.bf16.mxu0 0
      %598 = vmatpush1.bf16.xpose.msra.mxu0 0
      %599 = vmatprep.subr.bf16.mxu0 0
      %600 = vmatpush1.bf16.xpose.msra.mxu0 0
      %601 = vmatprep.subr.bf16.mxu0 0
      %602 = vmatpush1.bf16.xpose.msra.mxu0 0
      %603 = vmatprep.subr.bf16.mxu0 0
      %604 = vmatpush1.bf16.xpose.msra.mxu0 0
      %605 = vmatprep.subr.bf16.mxu0 0
      %606 = vmatpush1.bf16.xpose.msra.mxu0 %v589
      %607 = vmatprep.subr.bf16.mxu0 0
      %608 = vmatpush2.bf16.xpose.msra.mxu0 0
      %609 = vmatprep.subr.bf16.mxu0 0
      %610 = vmatpush2.bf16.xpose.msra.mxu0 0
      %611 = vmatprep.subr.bf16.mxu0 0
      %612 = vmatpush2.bf16.xpose.msra.mxu0 0
      %613 = vmatprep.subr.bf16.mxu0 0
      %614 = vmatpush2.bf16.xpose.msra.mxu0 0
      %615 = vmatprep.subr.bf16.mxu0 0
      %616 = vmatpush2.bf16.xpose.msra.mxu0 0
      %617 = vmatprep.subr.bf16.mxu0 0
      %618 = vmatpush2.bf16.xpose.msra.mxu0 0
      %619 = vmatprep.subr.bf16.mxu0 0
      %620 = vmatpush2.bf16.xpose.msra.mxu0 0
      %621 = vmatprep.subr.bf16.mxu0 0
      %622 = vmatpush2.bf16.xpose.msra.mxu0 0
      %623 = vmatprep.mubr.bf16.mxu0 0
      %624 = vmatmul.mubr.bf16.gmra.mxu0 %v586
      %v625 = vpop.f32.mrf.mxu0
      %v626 = vadd.f32 0.0, %v625
      %v627 = vpop.f32.mrf.mxu0
      %v628 = vpop.f32.mrf.mxu0
      %v629 = vpop.f32.mrf.mxu0
      %630 = vdwg.mxu0
      %v631 = vmul.f32 %v626, 0.35355338
      %v632 = vsel %vm584, %v631, -inf
      %633 = vmax.xlane.f32.xlu0 %v632
      %v634 = vpop.xlane.xlu0 %633
      %v635 = vsub.f32 %v631, %v634
      %v636 = vmul.f32 %v635, 1.442695
      %v637 = vpow.pop %v636
      %v638 = vsel %vm584, %v637, 0.0
      %639 = vadd.xlane.f32.xlu0 %v638
      %v640 = vpop.xlane.xlu0 %639
      %v641 = vrcp.pop %v640
      %v642 = vmul.f32 %v637, %v641
      %v643 = vpack.c.bf16 %v642, %v642
      %644 = vrot.lane.b32.xlu0 %v580, 64
      %v645 = vpop.permute.xlu0 %644
      %v647 = vsel %vm584, %v643, 0
      %vm649 = vcmask 1043456
      %v651 = vsel %vm649, %v645, 0
      %653 = vmatprep.subr.bf16.mxu0 0
      %654 = vmatpush1.bf16.msra.mxu0 0
      %655 = vmatprep.subr.bf16.mxu0 0
      %656 = vmatpush1.bf16.msra.mxu0 0
      %657 = vmatprep.subr.bf16.mxu0 0
      %658 = vmatpush1.bf16.msra.mxu0 0
      %659 = vmatprep.subr.bf16.mxu0 0
      %660 = vmatpush1.bf16.msra.mxu0 0
      %661 = vmatprep.subr.bf16.mxu0 0
      %662 = vmatpush1.bf16.msra.mxu0 0
      %663 = vmatprep.subr.bf16.mxu0 0
      %664 = vmatpush1.bf16.msra.mxu0 0
      %665 = vmatprep.subr.bf16.mxu0 0
      %666 = vmatpush1.bf16.msra.mxu0 0
      %667 = vmatprep.subr.bf16.mxu0 0
      %668 = vmatpush1.bf16.msra.mxu0 %v651
      %669 = vmatprep.subr.bf16.mxu0 0
      %670 = vmatpush2.bf16.msra.mxu0 0
      %671 = vmatprep.subr.bf16.mxu0 0
      %672 = vmatpush2.bf16.msra.mxu0 0
      %673 = vmatprep.subr.bf16.mxu0 0
      %674 = vmatpush2.bf16.msra.mxu0 0
      %675 = vmatprep.subr.bf16.mxu0 0
      %676 = vmatpush2.bf16.msra.mxu0 0
      %677 = vmatprep.subr.bf16.mxu0 0
      %678 = vmatpush2.bf16.msra.mxu0 0
      %679 = vmatprep.subr.bf16.mxu0 0
      %680 = vmatpush2.bf16.msra.mxu0 0
      %681 = vmatprep.subr.bf16.mxu0 0
      %682 = vmatpush2.bf16.msra.mxu0 0
      %683 = vmatprep.subr.bf16.mxu0 0
      %684 = vmatpush2.bf16.msra.mxu0 0
      %685 = vmatprep.mubr.bf16.mxu0 0
      %686 = vmatmul.mubr.bf16.gmra.mxu0 %v647
      %v687 = vpop.f32.mrf.mxu0
      %v688 = vadd.f32 0.0, %v687
      %v689 = vpop.f32.mrf.mxu0
      %v690 = vpop.f32.mrf.mxu0
      %v691 = vpop.f32.mrf.mxu0
      %692 = vdwg.mxu0
      %693 = vrot.lane.b32.xlu0 %v580, 120
      %v694 = vpop.permute.xlu0 %693
      %695 = vrot.lane.b32.xlu0 %v580, 88
      %v696 = vpop.permute.xlu0 %695
      %v698 = vsel %vm584, %v694, 0
      %v701 = vsel %vm584, %v696, 0
      %703 = vmatprep.subr.bf16.mxu0 0
      %704 = vmatpush1.bf16.xpose.msra.mxu0 0
      %705 = vmatprep.subr.bf16.mxu0 0
      %706 = vmatpush1.bf16.xpose.msra.mxu0 0
      %707 = vmatprep.subr.bf16.mxu0 0
      %708 = vmatpush1.bf16.xpose.msra.mxu0 0
      %709 = vmatprep.subr.bf16.mxu0 0
      %710 = vmatpush1.bf16.xpose.msra.mxu0 0
      %711 = vmatprep.subr.bf16.mxu0 0
      %712 = vmatpush1.bf16.xpose.msra.mxu0 0
      %713 = vmatprep.subr.bf16.mxu0 0
      %714 = vmatpush1.bf16.xpose.msra.mxu0 0
      %715 = vmatprep.subr.bf16.mxu0 0
      %716 = vmatpush1.bf16.xpose.msra.mxu0 0
      %717 = vmatprep.subr.bf16.mxu0 0
      %718 = vmatpush1.bf16.xpose.msra.mxu0 %v701
      %719 = vmatprep.subr.bf16.mxu0 0
      %720 = vmatpush2.bf16.xpose.msra.mxu0 0
      %721 = vmatprep.subr.bf16.mxu0 0
      %722 = vmatpush2.bf16.xpose.msra.mxu0 0
      %723 = vmatprep.subr.bf16.mxu0 0
      %724 = vmatpush2.bf16.xpose.msra.mxu0 0
      %725 = vmatprep.subr.bf16.mxu0 0
      %726 = vmatpush2.bf16.xpose.msra.mxu0 0
      %727 = vmatprep.subr.bf16.mxu0 0
      %728 = vmatpush2.bf16.xpose.msra.mxu0 0
      %729 = vmatprep.subr.bf16.mxu0 0
      %730 = vmatpush2.bf16.xpose.msra.mxu0 0
      %731 = vmatprep.subr.bf16.mxu0 0
      %732 = vmatpush2.bf16.xpose.msra.mxu0 0
      %733 = vmatprep.subr.bf16.mxu0 0
      %734 = vmatpush2.bf16.xpose.msra.mxu0 0
      %735 = vmatprep.mubr.bf16.mxu0 0
      %736 = vmatmul.mubr.bf16.gmra.mxu0 %v698
      %v737 = vpop.f32.mrf.mxu0
      %v738 = vadd.f32 0.0, %v737
      %v739 = vpop.f32.mrf.mxu0
      %v740 = vpop.f32.mrf.mxu0
      %v741 = vpop.f32.mrf.mxu0
      %742 = vdwg.mxu0
      %v743 = vmul.f32 %v738, 0.35355338
      %v744 = vsel %vm584, %v743, -inf
      %745 = vmax.xlane.f32.xlu0 %v744
      %v746 = vpop.xlane.xlu0 %745
      %v747 = vsub.f32 %v743, %v746
      %v748 = vmul.f32 %v747, 1.442695
      %v749 = vpow.pop %v748
      %v750 = vsel %vm584, %v749, 0.0
      %751 = vadd.xlane.f32.xlu0 %v750
      %v752 = vpop.xlane.xlu0 %751
      %v753 = vrcp.pop %v752
      %v754 = vmul.f32 %v749, %v753
      %v755 = vpack.c.bf16 %v754, %v754
      %756 = vrot.lane.b32.xlu0 %v580, 56
      %v757 = vpop.permute.xlu0 %756
      %v759 = vsel %vm584, %v755, 0
      %v762 = vsel %vm649, %v757, 0
      %764 = vmatprep.subr.bf16.mxu0 0
      %765 = vmatpush1.bf16.msra.mxu0 0
      %766 = vmatprep.subr.bf16.mxu0 0
      %767 = vmatpush1.bf16.msra.mxu0 0
      %768 = vmatprep.subr.bf16.mxu0 0
      %769 = vmatpush1.bf16.msra.mxu0 0
      %770 = vmatprep.subr.bf16.mxu0 0
      %771 = vmatpush1.bf16.msra.mxu0 0
      %772 = vmatprep.subr.bf16.mxu0 0
      %773 = vmatpush1.bf16.msra.mxu0 0
      %774 = vmatprep.subr.bf16.mxu0 0
      %775 = vmatpush1.bf16.msra.mxu0 0
      %776 = vmatprep.subr.bf16.mxu0 0
      %777 = vmatpush1.bf16.msra.mxu0 0
      %778 = vmatprep.subr.bf16.mxu0 0
      %779 = vmatpush1.bf16.msra.mxu0 %v762
      %780 = vmatprep.subr.bf16.mxu0 0
      %781 = vmatpush2.bf16.msra.mxu0 0
      %782 = vmatprep.subr.bf16.mxu0 0
      %783 = vmatpush2.bf16.msra.mxu0 0
      %784 = vmatprep.subr.bf16.mxu0 0
      %785 = vmatpush2.bf16.msra.mxu0 0
      %786 = vmatprep.subr.bf16.mxu0 0
      %787 = vmatpush2.bf16.msra.mxu0 0
      %788 = vmatprep.subr.bf16.mxu0 0
      %789 = vmatpush2.bf16.msra.mxu0 0
      %790 = vmatprep.subr.bf16.mxu0 0
      %791 = vmatpush2.bf16.msra.mxu0 0
      %792 = vmatprep.subr.bf16.mxu0 0
      %793 = vmatpush2.bf16.msra.mxu0 0
      %794 = vmatprep.subr.bf16.mxu0 0
      %795 = vmatpush2.bf16.msra.mxu0 0
      %796 = vmatprep.mubr.bf16.mxu0 0
      %797 = vmatmul.mubr.bf16.gmra.mxu0 %v759
      %v798 = vpop.f32.mrf.mxu0
      %v799 = vadd.f32 0.0, %v798
      %v800 = vpop.f32.mrf.mxu0
      %v801 = vpop.f32.mrf.mxu0
      %v802 = vpop.f32.mrf.mxu0
      %803 = vdwg.mxu0
      %804 = vrot.lane.b32.xlu0 %v580, 112
      %v805 = vpop.permute.xlu0 %804
      %806 = vrot.lane.b32.xlu0 %v580, 80
      %v807 = vpop.permute.xlu0 %806
      %v809 = vsel %vm584, %v805, 0
      %v812 = vsel %vm584, %v807, 0
      %814 = vmatprep.subr.bf16.mxu0 0
      %815 = vmatpush1.bf16.xpose.msra.mxu0 0
      %816 = vmatprep.subr.bf16.mxu0 0
      %817 = vmatpush1.bf16.xpose.msra.mxu0 0
      %818 = vmatprep.subr.bf16.mxu0 0
      %819 = vmatpush1.bf16.xpose.msra.mxu0 0
      %820 = vmatprep.subr.bf16.mxu0 0
      %821 = vmatpush1.bf16.xpose.msra.mxu0 0
      %822 = vmatprep.subr.bf16.mxu0 0
      %823 = vmatpush1.bf16.xpose.msra.mxu0 0
      %824 = vmatprep.subr.bf16.mxu0 0
      %825 = vmatpush1.bf16.xpose.msra.mxu0 0
      %826 = vmatprep.subr.bf16.mxu0 0
      %827 = vmatpush1.bf16.xpose.msra.mxu0 0
      %828 = vmatprep.subr.bf16.mxu0 0
      %829 = vmatpush1.bf16.xpose.msra.mxu0 %v812
      %830 = vmatprep.subr.bf16.mxu0 0
      %831 = vmatpush2.bf16.xpose.msra.mxu0 0
      %832 = vmatprep.subr.bf16.mxu0 0
      %833 = vmatpush2.bf16.xpose.msra.mxu0 0
      %834 = vmatprep.subr.bf16.mxu0 0
      %835 = vmatpush2.bf16.xpose.msra.mxu0 0
      %836 = vmatprep.subr.bf16.mxu0 0
      %837 = vmatpush2.bf16.xpose.msra.mxu0 0
      %838 = vmatprep.subr.bf16.mxu0 0
      %839 = vmatpush2.bf16.xpose.msra.mxu0 0
      %840 = vmatprep.subr.bf16.mxu0 0
      %841 = vmatpush2.bf16.xpose.msra.mxu0 0
      %842 = vmatprep.subr.bf16.mxu0 0
      %843 = vmatpush2.bf16.xpose.msra.mxu0 0
      %844 = vmatprep.subr.bf16.mxu0 0
      %845 = vmatpush2.bf16.xpose.msra.mxu0 0
      %846 = vmatprep.mubr.bf16.mxu0 0
      %847 = vmatmul.mubr.bf16.gmra.mxu0 %v809
      %v848 = vpop.f32.mrf.mxu0
      %v849 = vadd.f32 0.0, %v848
      %v850 = vpop.f32.mrf.mxu0
      %v851 = vpop.f32.mrf.mxu0
      %v852 = vpop.f32.mrf.mxu0
      %853 = vdwg.mxu0
      %v854 = vmul.f32 %v849, 0.35355338
      %v855 = vsel %vm584, %v854, -inf
      %856 = vmax.xlane.f32.xlu0 %v855
      %v857 = vpop.xlane.xlu0 %856
      %v858 = vsub.f32 %v854, %v857
      %v859 = vmul.f32 %v858, 1.442695
      %v860 = vpow.pop %v859
      %v861 = vsel %vm584, %v860, 0.0
      %862 = vadd.xlane.f32.xlu0 %v861
      %v863 = vpop.xlane.xlu0 %862
      %v864 = vrcp.pop %v863
      %v865 = vmul.f32 %v860, %v864
      %v866 = vpack.c.bf16 %v865, %v865
      %867 = vrot.lane.b32.xlu0 %v580, 48
      %v868 = vpop.permute.xlu0 %867
      %v870 = vsel %vm584, %v866, 0
      %v873 = vsel %vm649, %v868, 0
      %875 = vmatprep.subr.bf16.mxu0 0
      %876 = vmatpush1.bf16.msra.mxu0 0
      %877 = vmatprep.subr.bf16.mxu0 0
      %878 = vmatpush1.bf16.msra.mxu0 0
      %879 = vmatprep.subr.bf16.mxu0 0
      %880 = vmatpush1.bf16.msra.mxu0 0
      %881 = vmatprep.subr.bf16.mxu0 0
      %882 = vmatpush1.bf16.msra.mxu0 0
      %883 = vmatprep.subr.bf16.mxu0 0
      %884 = vmatpush1.bf16.msra.mxu0 0
      %885 = vmatprep.subr.bf16.mxu0 0
      %886 = vmatpush1.bf16.msra.mxu0 0
      %887 = vmatprep.subr.bf16.mxu0 0
      %888 = vmatpush1.bf16.msra.mxu0 0
      %889 = vmatprep.subr.bf16.mxu0 0
      %890 = vmatpush1.bf16.msra.mxu0 %v873
      %891 = vmatprep.subr.bf16.mxu0 0
      %892 = vmatpush2.bf16.msra.mxu0 0
      %893 = vmatprep.subr.bf16.mxu0 0
      %894 = vmatpush2.bf16.msra.mxu0 0
      %895 = vmatprep.subr.bf16.mxu0 0
      %896 = vmatpush2.bf16.msra.mxu0 0
      %897 = vmatprep.subr.bf16.mxu0 0
      %898 = vmatpush2.bf16.msra.mxu0 0
      %899 = vmatprep.subr.bf16.mxu0 0
      %900 = vmatpush2.bf16.msra.mxu0 0
      %901 = vmatprep.subr.bf16.mxu0 0
      %902 = vmatpush2.bf16.msra.mxu0 0
      %903 = vmatprep.subr.bf16.mxu0 0
      %904 = vmatpush2.bf16.msra.mxu0 0
      %905 = vmatprep.subr.bf16.mxu0 0
      %906 = vmatpush2.bf16.msra.mxu0 0
      %907 = vmatprep.mubr.bf16.mxu0 0
      %908 = vmatmul.mubr.bf16.gmra.mxu0 %v870
      %v909 = vpop.f32.mrf.mxu0
      %v910 = vadd.f32 0.0, %v909
      %v911 = vpop.f32.mrf.mxu0
      %v912 = vpop.f32.mrf.mxu0
      %v913 = vpop.f32.mrf.mxu0
      %914 = vdwg.mxu0
      %915 = vrot.lane.b32.xlu0 %v580, 104
      %v916 = vpop.permute.xlu0 %915
      %917 = vrot.lane.b32.xlu0 %v580, 72
      %v918 = vpop.permute.xlu0 %917
      %v920 = vsel %vm584, %v916, 0
      %v923 = vsel %vm584, %v918, 0
      %925 = vmatprep.subr.bf16.mxu0 0
      %926 = vmatpush1.bf16.xpose.msra.mxu0 0
      %927 = vmatprep.subr.bf16.mxu0 0
      %928 = vmatpush1.bf16.xpose.msra.mxu0 0
      %929 = vmatprep.subr.bf16.mxu0 0
      %930 = vmatpush1.bf16.xpose.msra.mxu0 0
      %931 = vmatprep.subr.bf16.mxu0 0
      %932 = vmatpush1.bf16.xpose.msra.mxu0 0
      %933 = vmatprep.subr.bf16.mxu0 0
      %934 = vmatpush1.bf16.xpose.msra.mxu0 0
      %935 = vmatprep.subr.bf16.mxu0 0
      %936 = vmatpush1.bf16.xpose.msra.mxu0 0
      %937 = vmatprep.subr.bf16.mxu0 0
      %938 = vmatpush1.bf16.xpose.msra.mxu0 0
      %939 = vmatprep.subr.bf16.mxu0 0
      %940 = vmatpush1.bf16.xpose.msra.mxu0 %v923
      %941 = vmatprep.subr.bf16.mxu0 0
      %942 = vmatpush2.bf16.xpose.msra.mxu0 0
      %943 = vmatprep.subr.bf16.mxu0 0
      %944 = vmatpush2.bf16.xpose.msra.mxu0 0
      %945 = vmatprep.subr.bf16.mxu0 0
      %946 = vmatpush2.bf16.xpose.msra.mxu0 0
      %947 = vmatprep.subr.bf16.mxu0 0
      %948 = vmatpush2.bf16.xpose.msra.mxu0 0
      %949 = vmatprep.subr.bf16.mxu0 0
      %950 = vmatpush2.bf16.xpose.msra.mxu0 0
      %951 = vmatprep.subr.bf16.mxu0 0
      %952 = vmatpush2.bf16.xpose.msra.mxu0 0
      %953 = vmatprep.subr.bf16.mxu0 0
      %954 = vmatpush2.bf16.xpose.msra.mxu0 0
      %955 = vmatprep.subr.bf16.mxu0 0
      %956 = vmatpush2.bf16.xpose.msra.mxu0 0
      %957 = vmatprep.mubr.bf16.mxu0 0
      %958 = vmatmul.mubr.bf16.gmra.mxu0 %v920
      %v959 = vpop.f32.mrf.mxu0
      %v960 = vadd.f32 0.0, %v959
      %v961 = vpop.f32.mrf.mxu0
      %v962 = vpop.f32.mrf.mxu0
      %v963 = vpop.f32.mrf.mxu0
      %964 = vdwg.mxu0
      %v965 = vmul.f32 %v960, 0.35355338
      %v966 = vsel %vm584, %v965, -inf
      %967 = vmax.xlane.f32.xlu0 %v966
      %v968 = vpop.xlane.xlu0 %967
      %v969 = vsub.f32 %v965, %v968
      %v970 = vmul.f32 %v969, 1.442695
      %v971 = vpow.pop %v970
      %v972 = vsel %vm584, %v971, 0.0
      %973 = vadd.xlane.f32.xlu0 %v972
      %v974 = vpop.xlane.xlu0 %973
      %v975 = vrcp.pop %v974
      %v976 = vmul.f32 %v971, %v975
      %v977 = vpack.c.bf16 %v976, %v976
      %978 = vrot.lane.b32.xlu0 %v580, 40
      %v979 = vpop.permute.xlu0 %978
      %v981 = vsel %vm584, %v977, 0
      %v984 = vsel %vm649, %v979, 0
      %986 = vmatprep.subr.bf16.mxu0 0
      %987 = vmatpush1.bf16.msra.mxu0 0
      %988 = vmatprep.subr.bf16.mxu0 0
      %989 = vmatpush1.bf16.msra.mxu0 0
      %990 = vmatprep.subr.bf16.mxu0 0
      %991 = vmatpush1.bf16.msra.mxu0 0
      %992 = vmatprep.subr.bf16.mxu0 0
      %993 = vmatpush1.bf16.msra.mxu0 0
      %994 = vmatprep.subr.bf16.mxu0 0
      %995 = vmatpush1.bf16.msra.mxu0 0
      %996 = vmatprep.subr.bf16.mxu0 0
      %997 = vmatpush1.bf16.msra.mxu0 0
      %998 = vmatprep.subr.bf16.mxu0 0
      %999 = vmatpush1.bf16.msra.mxu0 0
      %1000 = vmatprep.subr.bf16.mxu0 0
      %1001 = vmatpush1.bf16.msra.mxu0 %v984
      %1002 = vmatprep.subr.bf16.mxu0 0
      %1003 = vmatpush2.bf16.msra.mxu0 0
      %1004 = vmatprep.subr.bf16.mxu0 0
      %1005 = vmatpush2.bf16.msra.mxu0 0
      %1006 = vmatprep.subr.bf16.mxu0 0
      %1007 = vmatpush2.bf16.msra.mxu0 0
      %1008 = vmatprep.subr.bf16.mxu0 0
      %1009 = vmatpush2.bf16.msra.mxu0 0
      %1010 = vmatprep.subr.bf16.mxu0 0
      %1011 = vmatpush2.bf16.msra.mxu0 0
      %1012 = vmatprep.subr.bf16.mxu0 0
      %1013 = vmatpush2.bf16.msra.mxu0 0
      %1014 = vmatprep.subr.bf16.mxu0 0
      %1015 = vmatpush2.bf16.msra.mxu0 0
      %1016 = vmatprep.subr.bf16.mxu0 0
      %1017 = vmatpush2.bf16.msra.mxu0 0
      %1018 = vmatprep.mubr.bf16.mxu0 0
      %1019 = vmatmul.mubr.bf16.gmra.mxu0 %v981
      %v1020 = vpop.f32.mrf.mxu0
      %v1021 = vadd.f32 0.0, %v1020
      %v1022 = vpop.f32.mrf.mxu0
      %v1023 = vpop.f32.mrf.mxu0
      %v1024 = vpop.f32.mrf.mxu0
      %1025 = vdwg.mxu0
      %1027 = vrot.lane.b32.xlu0 %v799, 8
      %v1028 = vpop.permute.xlu0 %1027
      %1031 = vrot.lane.b32.xlu0 %v910, 16
      %v1032 = vpop.permute.xlu0 %1031
      %1035 = vrot.lane.b32.xlu0 %v1021, 24
      %v1036 = vpop.permute.xlu0 %1035
      %v1038 = vsel %vm584, %v688, %v1028
      %vm1039 = vcmask 130048
      %v1040 = vsel %vm1039, %v1038, %v1032
      %vm1041 = vcmask 195584
      %v1042 = vsel %vm1041, %v1040, %v1036
      %v1043 = vpack.c.bf16 %v1042, %v1042
      %v1044 = vld [vmem:[%s5] sm:$0xf]
      %v1045 = vld [vmem:[%s5 + $0x4] sm:$0xf]
      %v1046 = vld [vmem:[%s5 + $0x8] sm:$0xf]
      %v1047 = vld [vmem:[%s5 + $0xc] sm:$0xf]
      %v1048 = vld [vmem:[%s6] sm:$0x1]
      %v1050 = vlaneseq
      %v1051 = vshrl.u32 %v1050, 7
      %v1052 = vsub.s32 0, %v1051
      %v1053 = vrot.slane %v1048, %v1052
      %v1059 = vunpack.c.l.b16 %v1044
      %v1060 = vunpack.c.l.b16 %v1045
      %v1061 = vunpack.c.l.b16 %v1046
      %v1062 = vunpack.c.l.b16 %v1047
      %v1063 = vpack.c.b16 %v1060, %v1059
      %v1064 = vpack.c.b16 %v1062, %v1061
      %v1066 = vsel %vm440, %v1043, 0
      %v1069 = vsel %vm440, %v1063, 0
      %v1072 = vsel %vm440, %v1064, 0
      %1074 = vmatprep.subr.bf16.mxu0 0
      %1075 = vmatpush1.bf16.xpose.msra.mxu0 0
      %1076 = vmatprep.subr.bf16.mxu0 0
      %1077 = vmatpush1.bf16.xpose.msra.mxu0 0
      %1078 = vmatprep.subr.bf16.mxu0 0
      %1079 = vmatpush1.bf16.xpose.msra.mxu0 0
      %1080 = vmatprep.subr.bf16.mxu0 0
      %1081 = vmatpush1.bf16.xpose.msra.mxu0 0
      %1082 = vmatprep.subr.bf16.mxu0 0
      %1083 = vmatpush1.bf16.xpose.msra.mxu0 0
      %1084 = vmatprep.subr.bf16.mxu0 0
      %1085 = vmatpush1.bf16.xpose.msra.mxu0 0
      %1086 = vmatprep.subr.bf16.mxu0 0
      %1087 = vmatpush1.bf16.xpose.msra.mxu0 %v1072
      %1088 = vmatprep.subr.bf16.mxu0 0
      %1089 = vmatpush1.bf16.xpose.msra.mxu0 %v1069
      %1090 = vmatprep.subr.bf16.mxu0 0
      %1091 = vmatpush2.bf16.xpose.msra.mxu0 0
      %1092 = vmatprep.subr.bf16.mxu0 0
      %1093 = vmatpush2.bf16.xpose.msra.mxu0 0
      %1094 = vmatprep.subr.bf16.mxu0 0
      %1095 = vmatpush2.bf16.xpose.msra.mxu0 0
      %1096 = vmatprep.subr.bf16.mxu0 0
      %1097 = vmatpush2.bf16.xpose.msra.mxu0 0
      %1098 = vmatprep.subr.bf16.mxu0 0
      %1099 = vmatpush2.bf16.xpose.msra.mxu0 0
      %1100 = vmatprep.subr.bf16.mxu0 0
      %1101 = vmatpush2.bf16.xpose.msra.mxu0 0
      %1102 = vmatprep.subr.bf16.mxu0 0
      %1103 = vmatpush2.bf16.xpose.msra.mxu0 0
      %1104 = vmatprep.subr.bf16.mxu0 0
      %1105 = vmatpush2.bf16.xpose.msra.mxu0 0
      %1106 = vmatprep.mubr.bf16.mxu0 0
      %1107 = vmatmul.mubr.bf16.gmra.mxu0 %v1066
      %v1108 = vpop.f32.mrf.mxu0
      %v1109 = vadd.f32 %v1053, %v1108
      %v1110 = vpop.f32.mrf.mxu0
      %v1111 = vpop.f32.mrf.mxu0
      %v1112 = vpop.f32.mrf.mxu0
      %1113 = vdwg.mxu0
      %v1114 = vadd.f32 %v437, %v1109
      %v1115 = vld [vmem:[%s7] sm:$0x1]
      %v1116 = vld [vmem:[%s8] sm:$0x1]
      %v1117 = vsel %vm440, %v1114, 0.0
      %1118 = vadd.xlane.f32.xlu0 %v1117
      %v1119 = vpop.xlane.xlu0 %1118
      %v1120 = vmul.f32 %v1119, %v444
      %v1121 = vsub.f32 %v1114, %v1120
      %v1122 = vmul.f32 %v1121, %v1121
      %v1123 = vsel %vm440, %v1122, 0.0
      %1124 = vadd.xlane.f32.xlu0 %v1123
      %v1125 = vpop.xlane.xlu0 %1124
      %v1126 = vmul.f32 %v1125, %v444
      %v1127 = vadd.f32 %v1126, 1e-05
      %v1128 = vrsqrt.pop %v1127
      %v1129 = vmul.f32 %v1121, %v1128
      %v1131 = vlaneseq
      %v1132 = vshrl.u32 %v1131, 7
      %v1133 = vsub.s32 0, %v1132
      %v1134 = vrot.slane %v1115, %v1133
      %v1136 = vmul.f32 %v1129, %v1134
      %v1138 = vlaneseq
      %v1139 = vshrl.u32 %v1138, 7
      %v1140 = vsub.s32 0, %v1139
      %v1141 = vrot.slane %v1116, %v1140
      %v1143 = vadd.f32 %v1136, %v1141
      %v1144 = vpack.c.bf16 %v1143, %v1143
      %v1145 = vld [vmem:[%s9] sm:$0xf]
      %v1146 = vld [vmem:[%s9 + $0x4] sm:$0xf]
      %v1147 = vld [vmem:[%s9 + $0x8] sm:$0xf]
      %v1148 = vld [vmem:[%s9 + $0xc] sm:$0xf]
      %v1149 = vld [vmem:[%s9 + $0x10] sm:$0xf]
      %v1150 = vld [vmem:[%s9 + $0x14] sm:$0xf]
      %v1151 = vld [vmem:[%s9 + $0x18] sm:$0xf]
      %v1152 = vld [vmem:[%s9 + $0x1c] sm:$0xf]
      %v1153 = vld [vmem:[%s9 + $0x20] sm:$0xf]
      %v1154 = vld [vmem:[%s9 + $0x24] sm:$0xf]
      %v1155 = vld [vmem:[%s9 + $0x28] sm:$0xf]
      %v1156 = vld [vmem:[%s9 + $0x2c] sm:$0xf]
      %v1157 = vld [vmem:[%s9 + $0x30] sm:$0xf]
      %v1158 = vld [vmem:[%s9 + $0x34] sm:$0xf]
      %v1159 = vld [vmem:[%s9 + $0x38] sm:$0xf]
      %v1160 = vld [vmem:[%s9 + $0x3c] sm:$0xf]
      %v1161 = vld [vmem:[%s10] sm:$0x1]
      %v1163 = vlaneseq
      %v1164 = vshrl.u32 %v1163, 7
      %v1165 = vsub.s32 0, %v1164
      %v1166 = vrot.slane %v1161, %v1165
      %v1184 = vunpack.c.l.b16 %v1145
      %v1185 = vunpack.c.l.b16 %v1146
      %v1186 = vunpack.c.l.b16 %v1147
      %v1187 = vunpack.c.l.b16 %v1148
      %v1188 = vunpack.c.l.b16 %v1149
      %v1189 = vunpack.c.l.b16 %v1150
      %v1190 = vunpack.c.l.b16 %v1151
      %v1191 = vunpack.c.l.b16 %v1152
      %v1192 = vunpack.c.l.b16 %v1153
      %v1193 = vunpack.c.l.b16 %v1154
      %v1194 = vunpack.c.l.b16 %v1155
      %v1195 = vunpack.c.l.b16 %v1156
      %v1196 = vunpack.c.l.b16 %v1157
      %v1197 = vunpack.c.l.b16 %v1158
      %v1198 = vunpack.c.l.b16 %v1159
      %v1199 = vunpack.c.l.b16 %v1160
      %v1200 = vpack.c.b16 %v1185, %v1184
      %v1201 = vpack.c.b16 %v1187, %v1186
      %v1202 = vpack.c.b16 %v1189, %v1188
      %v1203 = vpack.c.b16 %v1191, %v1190
      %v1204 = vpack.c.b16 %v1193, %v1192
      %v1205 = vpack.c.b16 %v1195, %v1194
      %v1206 = vpack.c.b16 %v1197, %v1196
      %v1207 = vpack.c.b16 %v1199, %v1198
      %v1209 = vsel %vm440, %v1144, 0
      %v1212 = vsel %vm440, %v1200, 0
      %v1215 = vsel %vm440, %v1201, 0
      %v1218 = vsel %vm440, %v1202, 0
      %v1221 = vsel %vm440, %v1203, 0
      %v1224 = vsel %vm440, %v1204, 0
      %v1227 = vsel %vm440, %v1205, 0
      %v1230 = vsel %vm440, %v1206, 0
      %v1233 = vsel %vm440, %v1207, 0
      %1235 = vmatprep.subr.bf16.mxu0 0
      %1236 = vmatpush1.bf16.xpose.msra.mxu0 %v1233
      %1237 = vmatprep.subr.bf16.mxu0 0
      %1238 = vmatpush1.bf16.xpose.msra.mxu0 %v1230
      %1239 = vmatprep.subr.bf16.mxu0 0
      %1240 = vmatpush1.bf16.xpose.msra.mxu0 %v1227
      %1241 = vmatprep.subr.bf16.mxu0 0
      %1242 = vmatpush1.bf16.xpose.msra.mxu0 %v1224
      %1243 = vmatprep.subr.bf16.mxu0 0
      %1244 = vmatpush1.bf16.xpose.msra.mxu0 %v1221
      %1245 = vmatprep.subr.bf16.mxu0 0
      %1246 = vmatpush1.bf16.xpose.msra.mxu0 %v1218
      %1247 = vmatprep.subr.bf16.mxu0 0
      %1248 = vmatpush1.bf16.xpose.msra.mxu0 %v1215
      %1249 = vmatprep.subr.bf16.mxu0 0
      %1250 = vmatpush1.bf16.xpose.msra.mxu0 %v1212
      %1251 = vmatprep.subr.bf16.mxu0 0
      %1252 = vmatpush2.bf16.xpose.msra.mxu0 0
      %1253 = vmatprep.subr.bf16.mxu0 0
      %1254 = vmatpush2.bf16.xpose.msra.mxu0 0
      %1255 = vmatprep.subr.bf16.mxu0 0
      %1256 = vmatpush2.bf16.xpose.msra.mxu0 0
      %1257 = vmatprep.subr.bf16.mxu0 0
      %1258 = vmatpush2.bf16.xpose.msra.mxu0 0
      %1259 = vmatprep.subr.bf16.mxu0 0
      %1260 = vmatpush2.bf16.xpose.msra.mxu0 0
      %1261 = vmatprep.subr.bf16.mxu0 0
      %1262 = vmatpush2.bf16.xpose.msra.mxu0 0
      %1263 = vmatprep.subr.bf16.mxu0 0
      %1264 = vmatpush2.bf16.xpose.msra.mxu0 0
      %1265 = vmatprep.subr.bf16.mxu0 0
      %1266 = vmatpush2.bf16.xpose.msra.mxu0 0
      %1267 = vmatprep.mubr.bf16.mxu0 0
      %1268 = vmatmul.mubr.bf16.gmra.mxu0 %v1209
      %v1269 = vpop.f32.mrf.mxu0
      %v1270 = vadd.f32 %v1166, %v1269
      %v1271 = vpop.f32.mrf.mxu0
      %v1272 = vpop.f32.mrf.mxu0
      %v1273 = vpop.f32.mrf.mxu0
      %1274 = vdwg.mxu0
      %v1275 = vmul.f32 %v1270, 1.702
      %v1276 = vxor.u32 %v1275, 2147483648
      %v1277 = vmul.f32 %v1276, 1.442695
      %v1278 = vpow.pop %v1277
      %v1279 = vadd.f32 %v1278, 1.0
      %v1280 = vrcp.pop %v1279
      %v1281 = vmul.f32 1.0, %v1280
      %v1282 = vmul.f32 %v1270, %v1281
      %v1283 = vpack.c.bf16 %v1282, %v1282
      %v1284 = vld [vmem:[%s11] sm:$0xf]
      %v1285 = vld [vmem:[%s11 + $0x4] sm:$0xf]
      %v1286 = vld [vmem:[%s11 + $0x8] sm:$0xf]
      %v1287 = vld [vmem:[%s11 + $0xc] sm:$0xf]
      %v1288 = vld [vmem:[%s12] sm:$0x1]
      %v1290 = vlaneseq
      %v1291 = vshrl.u32 %v1290, 7
      %v1292 = vsub.s32 0, %v1291
      %v1293 = vrot.slane %v1288, %v1292
      %v1299 = vunpack.c.l.b16 %v1284
      %v1300 = vunpack.c.l.b16 %v1285
      %v1301 = vunpack.c.l.b16 %v1286
      %v1302 = vunpack.c.l.b16 %v1287
      %v1303 = vpack.c.b16 %v1300, %v1299
      %v1304 = vpack.c.b16 %v1302, %v1301
      %1307 = vmatprep.subr.bf16.mxu0 0
      %1308 = vmatpush1.bf16.xpose.msra.mxu0 0
      %1309 = vmatprep.subr.bf16.mxu0 0
      %1310 = vmatpush1.bf16.xpose.msra.mxu0 0
      %1311 = vmatprep.subr.bf16.mxu0 0
      %1312 = vmatpush1.bf16.xpose.msra.mxu0 0
      %1313 = vmatprep.subr.bf16.mxu0 0
      %1314 = vmatpush1.bf16.xpose.msra.mxu0 0
      %1315 = vmatprep.subr.bf16.mxu0 0
      %1316 = vmatpush1.bf16.xpose.msra.mxu0 0
      %1317 = vmatprep.subr.bf16.mxu0 0
      %1318 = vmatpush1.bf16.xpose.msra.mxu0 0
      %1319 = vmatprep.subr.bf16.mxu0 0
      %1320 = vmatpush1.bf16.xpose.msra.mxu0 %v1304
      %1321 = vmatprep.subr.bf16.mxu0 0
      %1322 = vmatpush1.bf16.xpose.msra.mxu0 %v1303
      %1323 = vmatprep.subr.bf16.mxu0 0
      %1324 = vmatpush2.bf16.xpose.msra.mxu0 0
      %1325 = vmatprep.subr.bf16.mxu0 0
      %1326 = vmatpush2.bf16.xpose.msra.mxu0 0
      %1327 = vmatprep.subr.bf16.mxu0 0
      %1328 = vmatpush2.bf16.xpose.msra.mxu0 0
      %1329 = vmatprep.subr.bf16.mxu0 0
      %1330 = vmatpush2.bf16.xpose.msra.mxu0 0
      %1331 = vmatprep.subr.bf16.mxu0 0
      %1332 = vmatpush2.bf16.xpose.msra.mxu0 0
      %1333 = vmatprep.subr.bf16.mxu0 0
      %1334 = vmatpush2.bf16.xpose.msra.mxu0 0
      %1335 = vmatprep.subr.bf16.mxu0 0
      %1336 = vmatpush2.bf16.xpose.msra.mxu0 0
      %1337 = vmatprep.subr.bf16.mxu0 0
      %1338 = vmatpush2.bf16.xpose.msra.mxu0 0
      %1339 = vmatprep.mubr.bf16.mxu0 0
      %1340 = vmatmul.mubr.bf16.gmra.mxu0 %v1283
      %v1341 = vpop.f32.mrf.mxu0
      %v1342 = vadd.f32 %v1293, %v1341
      %v1343 = vpop.f32.mrf.mxu0
      %v1344 = vpop.f32.mrf.mxu0
      %v1345 = vpop.f32.mrf.mxu0
      %1346 = vdwg.mxu0
      %v1347 = vadd.f32 %v1114, %v1342
      %1348 = vst.msk [vmem:[%s435] sm:$0xff] %vm440, %v1347
      %p1349 = scmp.lt.s32.totalorder %s24, 1
      %s1350 = scalar_select %p1349, %s24, 1
      %s1351 = smul.addr %s1350, 8
      %s1352 = scalar_lea.vmem %s13, %s1351
      // Predicated region
      $region73: #{residual_attention_block.1} parent=71 // pred_check
        %p1353 = pneg %p320
      $region74: #{residual_attention_block.1} parent=71 // pred_check_branch
        %1355 = sbr.rel (%p1353) target = $region76
      $region75: #{residual_attention_block.1} parent=71 // pred_region
        _
      $region76: #{residual_attention_block.1} parent=71 // pred_fallthru
        _
    $region72: #{residual_attention_block.1} parent=5 // pred_fallthru
      _
    %p1356 = scmp.le.s32.totalorder 2, %s19
    // Predicated region
    $region77: #{residual_attention_block.1} parent=5 // pred_check
      %p1357 = pneg %p1356
    $region78: #{residual_attention_block.1} parent=5 // pred_check_branch
      %1359 = sbr.rel (%p1357) target = $region80
    $region79: #{residual_attention_block.1} parent=5 // pred_region
      %s1360 = ssub.s32 %s19, 2
      // Predicated region
      $region81: #{residual_attention_block.1} parent=79 // pred_check
        %p1361 = pneg %p326
      $region82: #{residual_attention_block.1} parent=79 // pred_check_branch
        %1363 = sbr.rel (%p1361) target = $region84
      $region83: #{residual_attention_block.1} parent=79 // pred_region
        %p1364 = scmp.lt.s32.totalorder %s25, 1
        %s1365 = scalar_select %p1364, %s25, 1
        %s1366 = smul.addr %s1365, 8
        %s1367 = scalar_lea.vmem %s13, %s1366
      $region84: #{residual_attention_block.1} parent=79 // pred_fallthru
        _
    $region80: #{residual_attention_block.1} parent=5 // pred_fallthru
      _
  $region6: #{residual_attention_block.1} parent=0 // loop_footer
    %s23 = sadd.s32 1, %s19
  $region7: #{residual_attention_block.1} parent=0 // loop_footer_branch
    %18 = sbr.rel target = $region3
  $region8: #{residual_attention_block.1} parent=0 // loop_exit
    _

</llo_original>
